<compile_context>
chip_gen: v7x
topology: tpu7x:2x2x1
jax: 0.10.0
libtpu: 0.0.40
codegen_flags: <defaults>
</compile_context>

<pallas_src>
import functools

import numpy as np
import jax
import jax.numpy as jnp
from jax.experimental import pallas as pl
from jax.experimental.pallas import tpu as pltpu


def _cdiv(a, b):
    return -(-a // b)


def _round_up(x, m):
    return m * _cdiv(x, m)


# ---------------------------------------------------------------------------
# In-kernel helpers
# ---------------------------------------------------------------------------
def _elu(x):
    # ELU(alpha=1): x if x > 0 else exp(x) - 1 (clamp exp arg so unused branch is safe).
    return jnp.where(x > 0, x, jnp.exp(jnp.minimum(x, 0.0)) - 1.0)


# ---------------------------------------------------------------------------
# Fused kernel: conv stack (dense matmuls) + in-kernel goal one-hot + maxpool-before-ELU
#               + merged actor/critic heads + masked log_softmax
# ---------------------------------------------------------------------------
def acmodel_kernel(x_ref, g_ref,
                   w1i_ref, w1g_ref, b1_ref, w2_ref, b2_ref, w3_ref, b3_ref,
                   wh1_ref, bh1_ref, wh2_ref, bh2_ref, wh3_ref, bh3_ref,
                   out_ref, *, n_actions, group_stride):
    gs = group_stride

    def bdot(a, w_ref):
        # bf16 x bf16 matmul on the MXU with f32 accumulation.
        return jnp.dot(a.astype(jnp.bfloat16), w_ref[...],
                       preferred_element_type=jnp.float32)

    x = x_ref[...]                                             # (Bt, K_img_pad) bf16

    # Goal one-hot built in-kernel (iota + compare on the VPU), applied as a tiny matmul
    # against the goal rows of conv1 (pre-packed into w1g).
    g = g_ref[...]                                             # (Bt, 1) int32
    pos = jax.lax.broadcasted_iota(jnp.int32, (x.shape[0], w1g_ref.shape[0]), 1)
    hot = (pos == g).astype(jnp.bfloat16)                      # (Bt, WH_pad) bf16

    # Conv1 (2x2, valid) as dense matmuls; output columns grouped by pool tap (dh, dw).
    y1 = bdot(x, w1i_ref) + bdot(hot, w1g_ref) + b1_ref[...]   # (Bt, 4*gs) f32

    # MaxPool2d(2) BEFORE the ELU (ELU is monotonic => same result, 4x fewer exp()):
    # elementwise max of the four lane-aligned pool-tap groups, then one ELU.
    pooled = _elu(jnp.maximum(jnp.maximum(y1[:, 0 * gs:1 * gs], y1[:, 1 * gs:2 * gs]),
                              jnp.maximum(y1[:, 2 * gs:3 * gs], y1[:, 3 * gs:4 * gs])))

    # Conv2 + ELU, Conv3 + ELU (dense matmuls on the flat, lane-padded layouts).
    y2 = _elu(bdot(pooled, w2_ref) + b2_ref[...])              # (Bt, y2_pad)
    emb = _elu(bdot(y2, w3_ref) + b3_ref[...])                 # (Bt, emb_pad)

    # Merged actor/critic MLP heads (ReLU), 3 matmuls total.
    h1 = jnp.maximum(bdot(emb, wh1_ref) + bh1_ref[...], 0.0)   # (Bt, 256) [actor|critic]
    h2 = jnp.maximum(bdot(h1, wh2_ref) + bh2_ref[...], 0.0)    # (Bt, 128) [actor|critic]
    o3 = bdot(h2, wh3_ref) + bh3_ref[...]                      # (Bt, 128): logits[0:A], value[A]

    # Stable log_softmax over the logit lanes only; pack lane-dense output slab.
    lane = jax.lax.broadcasted_iota(jnp.int32, o3.shape, 1)
    is_logit = lane < n_actions
    masked = jnp.where(is_logit, o3, -1e30)
    m = jnp.max(masked, axis=1, keepdims=True)
    e = jnp.where(is_logit, jnp.exp(masked - m), 0.0)
    lse = jnp.log(jnp.sum(e, axis=1, keepdims=True))
    logp = masked - m - lse
    out_ref[...] = jnp.where(is_logit, logp,
                             jnp.where(lane == n_actions, o3, 0.0))


def _fused_call(xflat, gcol, p, *, bt, n_actions, group_stride):
    b_pad, k = xflat.shape
    weights = (p["w1i"], p["w1g"], p["b1"], p["w2"], p["b2"], p["w3"], p["b3"],
               p["wh1"], p["bh1"], p["wh2"], p["bh2"], p["wh3"], p["bh3"])

    def wspec(a):
        nd = a.ndim
        return pl.BlockSpec(a.shape, lambda i, _nd=nd: (0,) * _nd)  # resident across tiles

    kernel = functools.partial(acmodel_kernel, n_actions=n_actions,
                               group_stride=group_stride)
    return pl.pallas_call(
        kernel,
        out_shape=jax.ShapeDtypeStruct((b_pad, 128), jnp.float32),
        grid=(b_pad // bt,),
        in_specs=[pl.BlockSpec((bt, k), lambda i: (i, 0)),
                  pl.BlockSpec((bt, 1), lambda i: (i, 0))] +
                 [wspec(a) for a in weights],
        out_specs=pl.BlockSpec((bt, 128), lambda i: (i, 0)),
        compiler_params=pltpu.CompilerParams(
            dimension_semantics=("parallel",),
            vmem_limit_bytes=48 * 1024 * 1024),
    )(xflat, gcol, *weights)


# ---------------------------------------------------------------------------
# Offline parameter packing: express each 2x2 conv as a dense, lane-aligned matmul
# ---------------------------------------------------------------------------
def _dense_from_conv(w, h_in, w_in, n_rows, n_cols, row_fn, col_fn):
    """Valid 2x2 / stride-1 conv expressed as one dense (n_rows, n_cols) weight.
    w: (2, 2, cin, cout); row_fn(oh, ow, kh, kw, ci) -> input row; col_fn(oh, ow, co) -> column."""
    cin, cout = int(w.shape[2]), int(w.shape[3])
    ho, wo = h_in - 1, w_in - 1
    rows = np.zeros((ho, wo, 2, 2, cin, cout), np.int32)
    cols = np.zeros((ho, wo, 2, 2, cin, cout), np.int32)
    for oh in range(ho):
        for ow in range(wo):
            for kh in range(2):
                for kw in range(2):
                    for ci in range(cin):
                        r = row_fn(oh, ow, kh, kw, ci)
                        for co in range(cout):
                            rows[oh, ow, kh, kw, ci, co] = r
                            cols[oh, ow, kh, kw, ci, co] = col_fn(oh, ow, co)
    vals = jnp.broadcast_to(w[None, None], (ho, wo, 2, 2, cin, cout)).reshape(-1)
    wd = jnp.zeros((n_rows, n_cols), jnp.float32)
    return wd.at[rows.reshape(-1), cols.reshape(-1)].set(vals)


def _dense_bias(b, h_in, w_in, n_cols, col_fn):
    cout = int(b.shape[-1])
    ho, wo = h_in - 1, w_in - 1
    cols = np.zeros((ho, wo, cout), np.int32)
    for oh in range(ho):
        for ow in range(wo):
            for co in range(cout):
                cols[oh, ow, co] = col_fn(oh, ow, co)
    vals = jnp.broadcast_to(b.reshape(1, 1, cout), (ho, wo, cout)).reshape(-1)
    return jnp.zeros((1, n_cols), jnp.float32).at[0, cols.reshape(-1)].set(vals)


def pack_params(raw, width, height, n_actions):
    """One-time transform of ACModel parameters into the fused-kernel layout.
    NOTE: `width` is treated as the conv row axis and `height` as the column axis, matching
    x.reshape(B, -1) of a (B, width, height, C) array (self-consistent with torch's NCHW
    permute for these synthetic params; loading a real torch checkpoint needs a layout check)."""
    c1, c2, c3 = 16, 32, 64
    ho1, wo1 = width - 1, height - 1
    assert ho1 % 2 == 0 and wo1 % 2 == 0, \
        "MaxPool2d(2) drops odd trailing rows/cols; packing assumes even conv1 output"
    n_hp, n_wp = ho1 // 2, wo1 // 2                     # pooled spatial dims
    gs = _round_up(n_hp * n_wp * c1, 128)               # lane-aligned pool-group stride

    k_img = width * height * 3
    k_img_pad = _round_up(k_img, 128)                   # unmasked input DMA / matmul K
    wh_pad = _round_up(width * height, 128)             # padded in-kernel one-hot width

    # Conv1: output columns grouped by pool tap (dh, dw); within-group layout (hp, wp, c).
    def col1(oh, ow, co):
        g = (oh % 2) * 2 + (ow % 2)
        return g * gs + ((oh // 2) * n_wp + (ow // 2)) * c1 + co

    # Image channels (0..2): rows indexed by flattened (W, H, 3) input.
    w1i = _dense_from_conv(
        raw["w1"][:, :, :3, :], width, height, k_img_pad, 4 * gs,
        lambda oh, ow, kh, kw, ci: ((oh + kh) * height + (ow + kw)) * 3 + ci, col1)
    # Goal channel (3): rows indexed by the flat spatial position of the one-hot.
    w1g = _dense_from_conv(
        raw["w1"][:, :, 3:, :], width, height, wh_pad, 4 * gs,
        lambda oh, ow, kh, kw, ci: (oh + kh) * height + (ow + kw), col1)
    b1 = _dense_bias(raw["b1"].reshape(-1), width, height, 4 * gs, col1)

    # Conv2: input = pooled flat layout (hp, wp, c1) in the first n_hp*n_wp*c1 of gs lanes.
    h2o, w2o = n_hp - 1, n_wp - 1
    y2_pad = _round_up(h2o * w2o * c2, 128)

    def col2(oh, ow, co):
        return (oh * w2o + ow) * c2 + co
    w2 = _dense_from_conv(
        raw["w2"], n_hp, n_wp, gs, y2_pad,
        lambda oh, ow, kh, kw, ci: ((oh + kh) * n_wp + (ow + kw)) * c1 + ci, col2)
    b2 = _dense_bias(raw["b2"].reshape(-1), n_hp, n_wp, y2_pad, col2)

    # Conv3: output flattened in PyTorch NCHW order (C, H, W) to match x.reshape(B, -1),
    # padded to a full 128-lane embedding.
    h3o, w3o = h2o - 1, w2o - 1
    emb = h3o * w3o * c3
    emb_pad = _round_up(emb, 128)

    def col3(oh, ow, co):
        return co * (h3o * w3o) + oh * w3o + ow
    w3 = _dense_from_conv(
        raw["w3"], h2o, w2o, y2_pad, emb_pad,
        lambda oh, ow, kh, kw, ci: ((oh + kh) * w2o + (ow + kw)) * c2 + ci, col3)
    b3 = _dense_bias(raw["b3"].reshape(-1), h2o, w2o, emb_pad, col3)

    assert int(raw["wa1"].shape[0]) == emb
    a = n_actions
    assert a + 1 <= 128, "output slab is 128 lanes wide"

    # Merged actor/critic heads: [actor | critic] per layer; rows padded to emb_pad.
    wh1 = jnp.zeros((emb_pad, 256), jnp.float32)
    wh1 = wh1.at[:emb, :128].set(raw["wa1"]).at[:emb, 128:].set(raw["wc1"])
    bh1 = jnp.concatenate([raw["ba1"], raw["bc1"]], axis=1)                   # (1, 256)
    wh2 = jnp.zeros((256, 128), jnp.float32)
    wh2 = wh2.at[:128, :64].set(raw["wa2"]).at[128:, 64:].set(raw["wc2"])     # block-diag
    bh2 = jnp.concatenate([raw["ba2"], raw["bc2"]], axis=1)                   # (1, 128)
    wh3 = jnp.zeros((128, 128), jnp.float32)
    wh3 = wh3.at[:64, :a].set(raw["wa3"]).at[64:, a].set(raw["wc3"][:, 0])
    bh3 = jnp.zeros((1, 128), jnp.float32)
    bh3 = bh3.at[0, :a].set(raw["ba3"][0]).at[0, a].set(raw["bc3"][0, 0])

    bf = lambda x: x.astype(jnp.bfloat16)   # matmul operands in bf16, biases stay f32
    packed = dict(w1i=bf(w1i), w1g=bf(w1g), b1=b1, w2=bf(w2), b2=b2, w3=bf(w3), b3=b3,
                  wh1=bf(wh1), bh1=bh1, wh2=bf(wh2), bh2=bh2, wh3=bf(wh3), bh3=bh3)
    meta = dict(group_stride=gs, emb_size=emb, k_img_pad=k_img_pad, goal_pad=wh_pad)
    return packed, meta


# ---------------------------------------------------------------------------
# Parameters (deterministic, synthetic) — shapes follow ACModel.__init__
# ---------------------------------------------------------------------------
def init_acmodel_params(key, in_channels, n_actions, emb_size):
    ks = jax.random.split(key, 9)

    def conv(k, cin, cout):
        w = jax.random.normal(k, (2, 2, cin, cout), jnp.float32)
        return w / jnp.sqrt(float(2 * 2 * cin))

    def linear(k, cin, cout):
        # mimics init_params: W ~ N(0,1), each output row L2-normalized, bias = 0;
        # stored transposed (in, out) for the kernel.
        w = jax.random.normal(k, (cout, cin), jnp.float32)
        w = w / jnp.sqrt(jnp.sum(w * w, axis=1, keepdims=True))
        return w.T, jnp.zeros((1, cout), jnp.float32)

    p = {}
    p["w1"], p["b1"] = conv(ks[0], in_channels, 16), jnp.zeros((1, 16), jnp.float32)
    p["w2"], p["b2"] = conv(ks[1], 16, 32), jnp.zeros((1, 32), jnp.float32)
    p["w3"], p["b3"] = conv(ks[2], 32, 64), jnp.zeros((1, 64), jnp.float32)
    p["wa1"], p["ba1"] = linear(ks[3], emb_size, 128)
    p["wa2"], p["ba2"] = linear(ks[4], 128, 64)
    p["wa3"], p["ba3"] = linear(ks[5], 64, n_actions)
    p["wc1"], p["bc1"] = linear(ks[6], emb_size, 128)
    p["wc2"], p["bc2"] = linear(ks[7], 128, 64)
    p["wc3"], p["bc3"] = linear(ks[8], 64, 1)
    return p


# ---------------------------------------------------------------------------
# Forward pass (glue: flatten/cast/pad image, goal as int column; compute: fused kernel)
# ---------------------------------------------------------------------------
def acmodel_forward(packed, image, goal, memory=None, *,
                    width, height, n_actions, group_stride, k_img_pad):
    # image: (B, width, height, 3) — same HWC-last convention as obs.image
    # goal:  (B,) int index into width*height (one-hot is built inside the kernel)
    B = image.shape[0]
    k_img = width * height * 3
    xflat = image.astype(jnp.bfloat16).reshape(B, k_img)        # lane-dense bf16 image
    if k_img_pad > k_img:
        xflat = jnp.pad(xflat, ((0, 0), (0, k_img_pad - k_img)))
    gcol = goal.astype(jnp.int32).reshape(B, 1)

    # Balanced batch tiles: cap tile at 1024 rows, keep >= 2 grid steps for large B
    # (v7x dual-TensorCore sharding via "parallel"), round the tile to 8 sublanes.
    n_tiles = max(1, _cdiv(B, 1024))
    if B > 256 and n_tiles < 2:
        n_tiles = 2
    bt = 8 * _cdiv(_cdiv(B, n_tiles), 8)
    b_pad = bt * _cdiv(B, bt)
    if b_pad != B:
        xflat = jnp.pad(xflat, ((0, b_pad - B), (0, 0)))
        gcol = jnp.pad(gcol, ((0, b_pad - B), (0, 0)))

    out = _fused_call(xflat, gcol, packed, bt=bt, n_actions=n_actions,
                      group_stride=group_stride)                # (b_pad, 128) f32
    logp = out[:B, :n_actions]          # dist = Categorical(logits=log_softmax(actor(emb)))
    value = out[:B, n_actions]          # critic(emb).squeeze(1)
    # TODO(synk): use_memory (LSTMCell) and use_text (Embedding+GRU) branches are
    # disabled in this configuration and not implemented.
    return logp, value, memory


if __name__ == "__main__":
    key = jax.random.PRNGKey(0)
    kp, ki, kg = jax.random.split(key, 3)

    B, width, height, n_actions = 2, 7, 7, 7
    emb_size = ((width - 1) // 2 - 2) * ((height - 1) // 2 - 2) * 64    # = 64

    raw = init_acmodel_params(kp, in_channels=4, n_actions=n_actions, emb_size=emb_size)
    packed, meta = pack_params(raw, width, height, n_actions)

    image = jax.random.randint(ki, (B, width, height, 3), 0, 11).astype(jnp.float32)
    goal = jax.random.randint(kg, (B,), 0, width * height)

    fwd = jax.jit(functools.partial(acmodel_forward,
                                    width=width, height=height, n_actions=n_actions,
                                    group_stride=meta["group_stride"],
                                    k_img_pad=meta["k_img_pad"]))
    logp, value, memory = fwd(packed, image, goal)
    jax.block_until_ready((logp, value))

    assert logp.shape == (B, n_actions)
    assert value.shape == (B,)
    assert bool(jnp.all(jnp.isfinite(logp))) and bool(jnp.all(jnp.isfinite(value)))
    assert bool(jnp.allclose(jnp.exp(logp).sum(axis=1), 1.0, atol=1e-3))
    print("KERNEL_OK")
</pallas_src>

<mosaic_0001>
module attributes {stable_mosaic.version = 11 : i64} {
  func.func @acmodel_kernel(%arg0: i32, %arg1: memref<8x256xbf16, #tpu.memory_space<vmem>>, %arg2: memref<8x1xi32, #tpu.memory_space<vmem>>, %arg3: memref<256x1024xbf16, #tpu.memory_space<vmem>>, %arg4: memref<128x1024xbf16, #tpu.memory_space<vmem>>, %arg5: memref<1x1024xf32, #tpu.memory_space<vmem>>, %arg6: memref<256x128xbf16, #tpu.memory_space<vmem>>, %arg7: memref<1x128xf32, #tpu.memory_space<vmem>>, %arg8: memref<128x128xbf16, #tpu.memory_space<vmem>>, %arg9: memref<1x128xf32, #tpu.memory_space<vmem>>, %arg10: memref<128x256xbf16, #tpu.memory_space<vmem>>, %arg11: memref<1x256xf32, #tpu.memory_space<vmem>>, %arg12: memref<256x128xbf16, #tpu.memory_space<vmem>>, %arg13: memref<1x128xf32, #tpu.memory_space<vmem>>, %arg14: memref<128x128xbf16, #tpu.memory_space<vmem>>, %arg15: memref<1x128xf32, #tpu.memory_space<vmem>>, %arg16: memref<8x128xf32, #tpu.memory_space<vmem>>) attributes {dimension_semantics = [#tpu.dimension_semantics<parallel>], iteration_bounds = array<i64: 1>, scalar_prefetch = 0 : i64, scratch_operands = 0 : i64, tpu.core_type = #tpu.core_type<tc>, window_params = [{transform_indices = @transform_0, window_bounds = array<i64: 8, 256>}, {transform_indices = @transform_1, window_bounds = array<i64: 8, 1>}, {pipeline_mode = #tpu.pipeline_mode<synchronous>, transform_indices = @transform_2, window_bounds = array<i64: 256, 1024>}, {pipeline_mode = #tpu.pipeline_mode<synchronous>, transform_indices = @transform_3, window_bounds = array<i64: 128, 1024>}, {pipeline_mode = #tpu.pipeline_mode<synchronous>, transform_indices = @transform_4, window_bounds = array<i64: 1, 1024>}, {pipeline_mode = #tpu.pipeline_mode<synchronous>, transform_indices = @transform_5, window_bounds = array<i64: 256, 128>}, {pipeline_mode = #tpu.pipeline_mode<synchronous>, transform_indices = @transform_6, window_bounds = array<i64: 1, 128>}, {pipeline_mode = #tpu.pipeline_mode<synchronous>, transform_indices = @transform_7, window_bounds = array<i64: 128, 128>}, {pipeline_mode = #tpu.pipeline_mode<synchronous>, transform_indices = @transform_8, window_bounds = array<i64: 1, 128>}, {pipeline_mode = #tpu.pipeline_mode<synchronous>, transform_indices = @transform_9, window_bounds = array<i64: 128, 256>}, {pipeline_mode = #tpu.pipeline_mode<synchronous>, transform_indices = @transform_10, window_bounds = array<i64: 1, 256>}, {pipeline_mode = #tpu.pipeline_mode<synchronous>, transform_indices = @transform_11, window_bounds = array<i64: 256, 128>}, {pipeline_mode = #tpu.pipeline_mode<synchronous>, transform_indices = @transform_12, window_bounds = array<i64: 1, 128>}, {pipeline_mode = #tpu.pipeline_mode<synchronous>, transform_indices = @transform_13, window_bounds = array<i64: 128, 128>}, {pipeline_mode = #tpu.pipeline_mode<synchronous>, transform_indices = @transform_14, window_bounds = array<i64: 1, 128>}, {transform_indices = @transform_15, window_bounds = array<i64: 8, 128>}]} {
    %c0 = arith.constant 0 : index
    %c0_0 = arith.constant 0 : index
    %0 = vector.load %arg1[%c0, %c0_0] : memref<8x256xbf16, #tpu.memory_space<vmem>>, vector<8x256xbf16>
    %c0_1 = arith.constant 0 : index
    %c0_2 = arith.constant 0 : index
    %1 = vector.load %arg2[%c0_1, %c0_2] : memref<8x1xi32, #tpu.memory_space<vmem>>, vector<8x1xi32>
    %2 = tpu.iota {dimensions = array<i32: 1>} : vector<8x128xi32>
    %3 = vector.broadcast %1 : vector<8x1xi32> to vector<8x128xi32>
    %4 = arith.cmpi eq, %2, %3 : vector<8x128xi32>
    %5 = arith.extui %4 : vector<8x128xi1> to vector<8x128xi32>
    %6 = arith.sitofp %5 : vector<8x128xi32> to vector<8x128xf32>
    %7 = arith.truncf %6 : vector<8x128xf32> to vector<8x128xbf16>
    %c0_3 = arith.constant 0 : index
    %c0_4 = arith.constant 0 : index
    %8 = vector.load %arg3[%c0_3, %c0_4] : memref<256x1024xbf16, #tpu.memory_space<vmem>>, vector<256x1024xbf16>
    %cst = arith.constant dense<0.000000e+00> : vector<8x1024xf32>
    %9 = tpu.matmul %0, %8, %cst {dimension_numbers = #tpu.dot_dimension_numbers<[1], [0], [0], [1], [0, 0, 1, 1], [], []>} : vector<8x256xbf16>, vector<256x1024xbf16>, vector<8x1024xf32> -> vector<8x1024xf32>
    %c0_5 = arith.constant 0 : index
    %c0_6 = arith.constant 0 : index
    %10 = vector.load %arg4[%c0_5, %c0_6] : memref<128x1024xbf16, #tpu.memory_space<vmem>>, vector<128x1024xbf16>
    %cst_7 = arith.constant dense<0.000000e+00> : vector<8x1024xf32>
    %11 = tpu.matmul %7, %10, %cst_7 {dimension_numbers = #tpu.dot_dimension_numbers<[1], [0], [0], [1], [0, 0, 1, 1], [], []>} : vector<8x128xbf16>, vector<128x1024xbf16>, vector<8x1024xf32> -> vector<8x1024xf32>
    %12 = arith.addf %9, %11 : vector<8x1024xf32>
    %c0_8 = arith.constant 0 : index
    %c0_9 = arith.constant 0 : index
    %13 = vector.load %arg5[%c0_8, %c0_9] : memref<1x1024xf32, #tpu.memory_space<vmem>>, vector<1x1024xf32>
    %14 = vector.broadcast %13 : vector<1x1024xf32> to vector<8x1024xf32>
    %15 = arith.addf %12, %14 : vector<8x1024xf32>
    %16 = vector.extract_strided_slice %15 {offsets = [0, 0], sizes = [8, 256], strides = [1, 1]} : vector<8x1024xf32> to vector<8x256xf32>
    %17 = vector.extract_strided_slice %15 {offsets = [0, 256], sizes = [8, 256], strides = [1, 1]} : vector<8x1024xf32> to vector<8x256xf32>
    %18 = arith.maximumf %16, %17 : vector<8x256xf32>
    %19 = vector.extract_strided_slice %15 {offsets = [0, 512], sizes = [8, 256], strides = [1, 1]} : vector<8x1024xf32> to vector<8x256xf32>
    %20 = vector.extract_strided_slice %15 {offsets = [0, 768], sizes = [8, 256], strides = [1, 1]} : vector<8x1024xf32> to vector<8x256xf32>
    %21 = arith.maximumf %19, %20 : vector<8x256xf32>
    %22 = arith.maximumf %18, %21 : vector<8x256xf32>
    %cst_10 = arith.constant 0.000000e+00 : f32
    %23 = vector.broadcast %cst_10 : f32 to vector<8x256xf32>
    %24 = arith.cmpf ogt, %22, %23 : vector<8x256xf32>
    %cst_11 = arith.constant 0.000000e+00 : f32
    %25 = vector.broadcast %cst_11 : f32 to vector<8x256xf32>
    %26 = arith.minimumf %22, %25 : vector<8x256xf32>
    %27 = math.exp %26 : vector<8x256xf32>
    %cst_12 = arith.constant 1.000000e+00 : f32
    %28 = vector.broadcast %cst_12 : f32 to vector<8x256xf32>
    %29 = arith.subf %27, %28 : vector<8x256xf32>
    %30 = arith.select %24, %22, %29 : vector<8x256xi1>, vector<8x256xf32>
    %31 = arith.truncf %30 : vector<8x256xf32> to vector<8x256xbf16>
    %c0_13 = arith.constant 0 : index
    %c0_14 = arith.constant 0 : index
    %32 = vector.load %arg6[%c0_13, %c0_14] : memref<256x128xbf16, #tpu.memory_space<vmem>>, vector<256x128xbf16>
    %cst_15 = arith.constant dense<0.000000e+00> : vector<8x128xf32>
    %33 = tpu.matmul %31, %32, %cst_15 {dimension_numbers = #tpu.dot_dimension_numbers<[1], [0], [0], [1], [0, 0, 1, 1], [], []>} : vector<8x256xbf16>, vector<256x128xbf16>, vector<8x128xf32> -> vector<8x128xf32>
    %c0_16 = arith.constant 0 : index
    %c0_17 = arith.constant 0 : index
    %34 = vector.load %arg7[%c0_16, %c0_17] : memref<1x128xf32, #tpu.memory_space<vmem>>, vector<1x128xf32>
    %35 = vector.broadcast %34 : vector<1x128xf32> to vector<8x128xf32>
    %36 = arith.addf %33, %35 : vector<8x128xf32>
    %cst_18 = arith.constant 0.000000e+00 : f32
    %37 = vector.broadcast %cst_18 : f32 to vector<8x128xf32>
    %38 = arith.cmpf ogt, %36, %37 : vector<8x128xf32>
    %cst_19 = arith.constant 0.000000e+00 : f32
    %39 = vector.broadcast %cst_19 : f32 to vector<8x128xf32>
    %40 = arith.minimumf %36, %39 : vector<8x128xf32>
    %41 = math.exp %40 : vector<8x128xf32>
    %cst_20 = arith.constant 1.000000e+00 : f32
    %42 = vector.broadcast %cst_20 : f32 to vector<8x128xf32>
    %43 = arith.subf %41, %42 : vector<8x128xf32>
    %44 = arith.select %38, %36, %43 : vector<8x128xi1>, vector<8x128xf32>
    %45 = arith.truncf %44 : vector<8x128xf32> to vector<8x128xbf16>
    %c0_21 = arith.constant 0 : index
    %c0_22 = arith.constant 0 : index
    %46 = vector.load %arg8[%c0_21, %c0_22] : memref<128x128xbf16, #tpu.memory_space<vmem>>, vector<128x128xbf16>
    %cst_23 = arith.constant dense<0.000000e+00> : vector<8x128xf32>
    %47 = tpu.matmul %45, %46, %cst_23 {dimension_numbers = #tpu.dot_dimension_numbers<[1], [0], [0], [1], [0, 0, 1, 1], [], []>} : vector<8x128xbf16>, vector<128x128xbf16>, vector<8x128xf32> -> vector<8x128xf32>
    %c0_24 = arith.constant 0 : index
    %c0_25 = arith.constant 0 : index
    %48 = vector.load %arg9[%c0_24, %c0_25] : memref<1x128xf32, #tpu.memory_space<vmem>>, vector<1x128xf32>
    %49 = vector.broadcast %48 : vector<1x128xf32> to vector<8x128xf32>
    %50 = arith.addf %47, %49 : vector<8x128xf32>
    %cst_26 = arith.constant 0.000000e+00 : f32
    %51 = vector.broadcast %cst_26 : f32 to vector<8x128xf32>
    %52 = arith.cmpf ogt, %50, %51 : vector<8x128xf32>
    %cst_27 = arith.constant 0.000000e+00 : f32
    %53 = vector.broadcast %cst_27 : f32 to vector<8x128xf32>
    %54 = arith.minimumf %50, %53 : vector<8x128xf32>
    %55 = math.exp %54 : vector<8x128xf32>
    %cst_28 = arith.constant 1.000000e+00 : f32
    %56 = vector.broadcast %cst_28 : f32 to vector<8x128xf32>
    %57 = arith.subf %55, %56 : vector<8x128xf32>
    %58 = arith.select %52, %50, %57 : vector<8x128xi1>, vector<8x128xf32>
    %59 = arith.truncf %58 : vector<8x128xf32> to vector<8x128xbf16>
    %c0_29 = arith.constant 0 : index
    %c0_30 = arith.constant 0 : index
    %60 = vector.load %arg10[%c0_29, %c0_30] : memref<128x256xbf16, #tpu.memory_space<vmem>>, vector<128x256xbf16>
    %cst_31 = arith.constant dense<0.000000e+00> : vector<8x256xf32>
    %61 = tpu.matmul %59, %60, %cst_31 {dimension_numbers = #tpu.dot_dimension_numbers<[1], [0], [0], [1], [0, 0, 1, 1], [], []>} : vector<8x128xbf16>, vector<128x256xbf16>, vector<8x256xf32> -> vector<8x256xf32>
    %c0_32 = arith.constant 0 : index
    %c0_33 = arith.constant 0 : index
    %62 = vector.load %arg11[%c0_32, %c0_33] : memref<1x256xf32, #tpu.memory_space<vmem>>, vector<1x256xf32>
    %63 = vector.broadcast %62 : vector<1x256xf32> to vector<8x256xf32>
    %64 = arith.addf %61, %63 : vector<8x256xf32>
    %cst_34 = arith.constant 0.000000e+00 : f32
    %65 = vector.broadcast %cst_34 : f32 to vector<8x256xf32>
    %66 = arith.maximumf %64, %65 : vector<8x256xf32>
    %67 = arith.truncf %66 : vector<8x256xf32> to vector<8x256xbf16>
    %c0_35 = arith.constant 0 : index
    %c0_36 = arith.constant 0 : index
    %68 = vector.load %arg12[%c0_35, %c0_36] : memref<256x128xbf16, #tpu.memory_space<vmem>>, vector<256x128xbf16>
    %cst_37 = arith.constant dense<0.000000e+00> : vector<8x128xf32>
    %69 = tpu.matmul %67, %68, %cst_37 {dimension_numbers = #tpu.dot_dimension_numbers<[1], [0], [0], [1], [0, 0, 1, 1], [], []>} : vector<8x256xbf16>, vector<256x128xbf16>, vector<8x128xf32> -> vector<8x128xf32>
    %c0_38 = arith.constant 0 : index
    %c0_39 = arith.constant 0 : index
    %70 = vector.load %arg13[%c0_38, %c0_39] : memref<1x128xf32, #tpu.memory_space<vmem>>, vector<1x128xf32>
    %71 = vector.broadcast %70 : vector<1x128xf32> to vector<8x128xf32>
    %72 = arith.addf %69, %71 : vector<8x128xf32>
    %cst_40 = arith.constant 0.000000e+00 : f32
    %73 = vector.broadcast %cst_40 : f32 to vector<8x128xf32>
    %74 = arith.maximumf %72, %73 : vector<8x128xf32>
    %75 = arith.truncf %74 : vector<8x128xf32> to vector<8x128xbf16>
    %c0_41 = arith.constant 0 : index
    %c0_42 = arith.constant 0 : index
    %76 = vector.load %arg14[%c0_41, %c0_42] : memref<128x128xbf16, #tpu.memory_space<vmem>>, vector<128x128xbf16>
    %cst_43 = arith.constant dense<0.000000e+00> : vector<8x128xf32>
    %77 = tpu.matmul %75, %76, %cst_43 {dimension_numbers = #tpu.dot_dimension_numbers<[1], [0], [0], [1], [0, 0, 1, 1], [], []>} : vector<8x128xbf16>, vector<128x128xbf16>, vector<8x128xf32> -> vector<8x128xf32>
    %c0_44 = arith.constant 0 : index
    %c0_45 = arith.constant 0 : index
    %78 = vector.load %arg15[%c0_44, %c0_45] : memref<1x128xf32, #tpu.memory_space<vmem>>, vector<1x128xf32>
    %79 = vector.broadcast %78 : vector<1x128xf32> to vector<8x128xf32>
    %80 = arith.addf %77, %79 : vector<8x128xf32>
    %81 = tpu.iota {dimensions = array<i32: 1>} : vector<8x128xi32>
    %c7_i32 = arith.constant 7 : i32
    %82 = vector.broadcast %c7_i32 : i32 to vector<8x128xi32>
    %83 = arith.cmpi slt, %81, %82 : vector<8x128xi32>
    %cst_46 = arith.constant -1.000000e+30 : f32
    %84 = vector.broadcast %cst_46 : f32 to vector<8x128xf32>
    %85 = arith.select %83, %80, %84 : vector<8x128xi1>, vector<8x128xf32>
    %cst_47 = arith.constant dense<0xFF800000> : vector<8xf32>
    %86 = vector.multi_reduction <maximumf>, %85, %cst_47 [1] : vector<8x128xf32> to vector<8xf32>
    %87 = vector.shape_cast %86 : vector<8xf32> to vector<8x1xf32>
    %88 = vector.broadcast %87 : vector<8x1xf32> to vector<8x128xf32>
    %89 = arith.subf %85, %88 : vector<8x128xf32>
    %90 = math.exp %89 : vector<8x128xf32>
    %cst_48 = arith.constant 0.000000e+00 : f32
    %91 = vector.broadcast %cst_48 : f32 to vector<8x128xf32>
    %92 = arith.select %83, %90, %91 : vector<8x128xi1>, vector<8x128xf32>
    %cst_49 = arith.constant dense<0.000000e+00> : vector<8xf32>
    %93 = vector.multi_reduction <add>, %92, %cst_49 [1] : vector<8x128xf32> to vector<8xf32>
    %94 = vector.shape_cast %93 : vector<8xf32> to vector<8x1xf32>
    %95 = math.log %94 : vector<8x1xf32>
    %96 = vector.broadcast %87 : vector<8x1xf32> to vector<8x128xf32>
    %97 = arith.subf %85, %96 : vector<8x128xf32>
    %98 = vector.broadcast %95 : vector<8x1xf32> to vector<8x128xf32>
    %99 = arith.subf %97, %98 : vector<8x128xf32>
    %c7_i32_50 = arith.constant 7 : i32
    %100 = vector.broadcast %c7_i32_50 : i32 to vector<8x128xi32>
    %101 = arith.cmpi eq, %81, %100 : vector<8x128xi32>
    %cst_51 = arith.constant 0.000000e+00 : f32
    %102 = vector.broadcast %cst_51 : f32 to vector<8x128xf32>
    %103 = arith.select %101, %80, %102 : vector<8x128xi1>, vector<8x128xf32>
    %104 = arith.select %83, %99, %103 : vector<8x128xi1>, vector<8x128xf32>
    %c0_52 = arith.constant 0 : index
    %c0_53 = arith.constant 0 : index
    %105 = vector.load %arg16[%c0_52, %c0_53] : memref<8x128xf32, #tpu.memory_space<vmem>>, vector<8x128xf32>
    tpu.vector_store %arg16[%c0_52, %c0_53], %104 {strides = array<i32>} : memref<8x128xf32, #tpu.memory_space<vmem>>, vector<8x128xf32>,
    return
  }
  func.func @transform_0(%arg0: i32) -> (i32, i32) {
    %c0_i32 = arith.constant 0 : i32
    %c0_i32_0 = arith.constant 0 : i32
    return %arg0, %c0_i32 : i32, i32
  }
  func.func @transform_1(%arg0: i32) -> (i32, i32) {
    %c0_i32 = arith.constant 0 : i32
    %c0_i32_0 = arith.constant 0 : i32
    return %arg0, %c0_i32 : i32, i32
  }
  func.func @transform_2(%arg0: i32) -> (i32, i32) {
    %c0_i32 = arith.constant 0 : i32
    %c0_i32_0 = arith.constant 0 : i32
    %c0_i32_1 = arith.constant 0 : i32
    return %c0_i32, %c0_i32_0 : i32, i32
  }
  func.func @transform_3(%arg0: i32) -> (i32, i32) {
    %c0_i32 = arith.constant 0 : i32
    %c0_i32_0 = arith.constant 0 : i32
    %c0_i32_1 = arith.constant 0 : i32
    return %c0_i32, %c0_i32_0 : i32, i32
  }
  func.func @transform_4(%arg0: i32) -> (i32, i32) {
    %c0_i32 = arith.constant 0 : i32
    %c0_i32_0 = arith.constant 0 : i32
    %c0_i32_1 = arith.constant 0 : i32
    return %c0_i32, %c0_i32_0 : i32, i32
  }
  func.func @transform_5(%arg0: i32) -> (i32, i32) {
    %c0_i32 = arith.constant 0 : i32
    %c0_i32_0 = arith.constant 0 : i32
    %c0_i32_1 = arith.constant 0 : i32
    return %c0_i32, %c0_i32_0 : i32, i32
  }
  func.func @transform_6(%arg0: i32) -> (i32, i32) {
    %c0_i32 = arith.constant 0 : i32
    %c0_i32_0 = arith.constant 0 : i32
    %c0_i32_1 = arith.constant 0 : i32
    return %c0_i32, %c0_i32_0 : i32, i32
  }
  func.func @transform_7(%arg0: i32) -> (i32, i32) {
    %c0_i32 = arith.constant 0 : i32
    %c0_i32_0 = arith.constant 0 : i32
    %c0_i32_1 = arith.constant 0 : i32
    return %c0_i32, %c0_i32_0 : i32, i32
  }
  func.func @transform_8(%arg0: i32) -> (i32, i32) {
    %c0_i32 = arith.constant 0 : i32
    %c0_i32_0 = arith.constant 0 : i32
    %c0_i32_1 = arith.constant 0 : i32
    return %c0_i32, %c0_i32_0 : i32, i32
  }
  func.func @transform_9(%arg0: i32) -> (i32, i32) {
    %c0_i32 = arith.constant 0 : i32
    %c0_i32_0 = arith.constant 0 : i32
    %c0_i32_1 = arith.constant 0 : i32
    return %c0_i32, %c0_i32_0 : i32, i32
  }
  func.func @transform_10(%arg0: i32) -> (i32, i32) {
    %c0_i32 = arith.constant 0 : i32
    %c0_i32_0 = arith.constant 0 : i32
    %c0_i32_1 = arith.constant 0 : i32
    return %c0_i32, %c0_i32_0 : i32, i32
  }
  func.func @transform_11(%arg0: i32) -> (i32, i32) {
    %c0_i32 = arith.constant 0 : i32
    %c0_i32_0 = arith.constant 0 : i32
    %c0_i32_1 = arith.constant 0 : i32
    return %c0_i32, %c0_i32_0 : i32, i32
  }
  func.func @transform_12(%arg0: i32) -> (i32, i32) {
    %c0_i32 = arith.constant 0 : i32
    %c0_i32_0 = arith.constant 0 : i32
    %c0_i32_1 = arith.constant 0 : i32
    return %c0_i32, %c0_i32_0 : i32, i32
  }
  func.func @transform_13(%arg0: i32) -> (i32, i32) {
    %c0_i32 = arith.constant 0 : i32
    %c0_i32_0 = arith.constant 0 : i32
    %c0_i32_1 = arith.constant 0 : i32
    return %c0_i32, %c0_i32_0 : i32, i32
  }
  func.func @transform_14(%arg0: i32) -> (i32, i32) {
    %c0_i32 = arith.constant 0 : i32
    %c0_i32_0 = arith.constant 0 : i32
    %c0_i32_1 = arith.constant 0 : i32
    return %c0_i32, %c0_i32_0 : i32, i32
  }
  func.func @transform_15(%arg0: i32) -> (i32, i32) {
    %c0_i32 = arith.constant 0 : i32
    %c0_i32_0 = arith.constant 0 : i32
    return %arg0, %c0_i32 : i32, i32
  }
}

</mosaic_0001>

<llo_original>
// kernel: acmodel_forward.1
$region0: #{acmodel_forward.1}
  #allocation0 [shape = 'u32[]', space=smem, size = 0x4, offset = 0x4, fixed_abs, tag = 'smem constant byte address 0x4 - core index']
  #allocation1 [shape = 'u32[144,128]{1,0:T(1,128)}', space=vmem, size = 0x12000, scoped, tag = 'internal scratch']
  %s0 = inlined_call_operand.vmem [shape: bf16[8,256], index: 0, kind: input, shape index: {}]
  %s1 = inlined_call_operand.vmem [shape: s32[8,1], index: 1, kind: input, shape index: {}]
  %s2 = inlined_call_operand.hbm [shape: bf16[256,1024], index: 2, kind: input, shape index: {}]
  %s3 = inlined_call_operand.hbm [shape: bf16[128,1024], index: 3, kind: input, shape index: {}]
  %s4 = inlined_call_operand.vmem [shape: f32[1,1024], index: 4, kind: input, shape index: {}]
  %s5 = inlined_call_operand.vmem [shape: bf16[256,128], index: 5, kind: input, shape index: {}]
  %s6 = inlined_call_operand.vmem [shape: f32[1,128], index: 6, kind: input, shape index: {}]
  %s7 = inlined_call_operand.vmem [shape: bf16[128,128], index: 7, kind: input, shape index: {}]
  %s8 = inlined_call_operand.vmem [shape: f32[1,128], index: 8, kind: input, shape index: {}]
  %s9 = inlined_call_operand.hbm [shape: bf16[128,256], index: 9, kind: input, shape index: {}]
  %s10 = inlined_call_operand.vmem [shape: f32[1,256], index: 10, kind: input, shape index: {}]
  %s11 = inlined_call_operand.hbm [shape: bf16[256,128], index: 11, kind: input, shape index: {}]
  %s12 = inlined_call_operand.vmem [shape: f32[1,128], index: 12, kind: input, shape index: {}]
  %s13 = inlined_call_operand.hbm [shape: bf16[128,128], index: 13, kind: input, shape index: {}]
  %s14 = inlined_call_operand.vmem [shape: f32[1,128], index: 14, kind: input, shape index: {}]
  %s15 = inlined_call_operand.vmem [shape: f32[8,128], index: 15, kind: output, shape index: {}]
  %s16 = sld [smem:[#allocation0]]
  $region90: #{acmodel_forward.1} parent=0
    _
  %s18 = ssub.s32 1, %s16
  %s19 = scalar_select 0, %s18, %s16
  $region1: #{acmodel_forward.1} parent=0
    #allocation2 [shape = 'u8[524288]{0}', space=vmem, size = 0x80000, scoped, tag = 'input window, operand 2, single buffered']
    #allocation3 [shape = 's32[1]{0}', space=sflag, size = 0x4, scoped, tag = 'scoped memory for acmodel_forward.1']
    #allocation4 [shape = 'u8[262144]{0}', space=vmem, size = 0x40000, scoped, tag = 'input window, operand 3, single buffered']
    #allocation5 [shape = 's32[1]{0}', space=sflag, size = 0x4, scoped, tag = 'scoped memory for acmodel_forward.1']
    #allocation6 [shape = 'u8[65536]{0}', space=vmem, size = 0x10000, scoped, tag = 'input window, operand 9, single buffered']
    #allocation7 [shape = 'u8[65536]{0}', space=vmem, size = 0x10000, scoped, tag = 'input window, operand 11, single buffered']
    #allocation8 [shape = 's32[1]{0}', space=sflag, size = 0x4, scoped, tag = 'scoped memory for acmodel_forward.1']
    #allocation9 [shape = 'u8[32768]{0}', space=vmem, size = 0x8000, scoped, tag = 'input window, operand 13, single buffered']
    %20 = vsyncpa [#allocation3], 0
    %21 = vsyncpa [#allocation5], 0
    %22 = vsyncpa [#allocation8], 0
    // Predicated region
    $region2: #{acmodel_forward.1} parent=1 // pred_check
      _
    $region3: #{acmodel_forward.1} parent=1 // pred_check_branch
      %24 = sbr.rel (0) target = $region5
    $region4: #{acmodel_forward.1} parent=1 // pred_region
      _
    $region5: #{acmodel_forward.1} parent=1 // pred_fallthru
      _
    // Predicated region
    $region6: #{acmodel_forward.1} parent=1 // pred_check
      _
    $region7: #{acmodel_forward.1} parent=1 // pred_check_branch
      %26 = sbr.rel (0) target = $region9
    $region8: #{acmodel_forward.1} parent=1 // pred_region
      _
    $region9: #{acmodel_forward.1} parent=1 // pred_fallthru
      _
    // Predicated region
    $region10: #{acmodel_forward.1} parent=1 // pred_check
      _
    $region11: #{acmodel_forward.1} parent=1 // pred_check_branch
      %28 = sbr.rel (0) target = $region13
    $region12: #{acmodel_forward.1} parent=1 // pred_region
      %s30 = ssub.s32 16384, 16384
      %31 = vsyncadd [#allocation3], %s30
      %s32 = sshll.u32 [#allocation2], 4
      %s33 = int_to_ptr.vmem [resolvable:$true] %s32
      %38 = dma.hbm_to_vmem [thread:$0]  %s2, 16384, %s33, [#allocation3], 512, 512, 32
    $region13: #{acmodel_forward.1} parent=1 // pred_fallthru
      _
    // Predicated region
    $region14: #{acmodel_forward.1} parent=1 // pred_check
      _
    $region15: #{acmodel_forward.1} parent=1 // pred_check_branch
      %40 = sbr.rel (0) target = $region17
    $region16: #{acmodel_forward.1} parent=1 // pred_region
      %s42 = ssub.s32 8192, 8192
      %43 = vsyncadd [#allocation5], %s42
      %s44 = sshll.u32 [#allocation4], 4
      %s45 = int_to_ptr.vmem [resolvable:$true] %s44
      %50 = dma.hbm_to_vmem [thread:$0]  %s3, 8192, %s45, [#allocation5], 512, 512, 32
    $region17: #{acmodel_forward.1} parent=1 // pred_fallthru
      _
    // Predicated region
    $region18: #{acmodel_forward.1} parent=1 // pred_check
      _
    $region19: #{acmodel_forward.1} parent=1 // pred_check_branch
      %52 = sbr.rel (0) target = $region21
    $region20: #{acmodel_forward.1} parent=1 // pred_region
      _
    $region21: #{acmodel_forward.1} parent=1 // pred_fallthru
      _
    // Predicated region
    $region22: #{acmodel_forward.1} parent=1 // pred_check
      _
    $region23: #{acmodel_forward.1} parent=1 // pred_check_branch
      %54 = sbr.rel (0) target = $region25
    $region24: #{acmodel_forward.1} parent=1 // pred_region
      _
    $region25: #{acmodel_forward.1} parent=1 // pred_fallthru
      _
    // Predicated region
    $region26: #{acmodel_forward.1} parent=1 // pred_check
      _
    $region27: #{acmodel_forward.1} parent=1 // pred_check_branch
      %56 = sbr.rel (0) target = $region29
    $region28: #{acmodel_forward.1} parent=1 // pred_region
      _
    $region29: #{acmodel_forward.1} parent=1 // pred_fallthru
      _
    // Predicated region
    $region30: #{acmodel_forward.1} parent=1 // pred_check
      _
    $region31: #{acmodel_forward.1} parent=1 // pred_check_branch
      %58 = sbr.rel (0) target = $region33
    $region32: #{acmodel_forward.1} parent=1 // pred_region
      _
    $region33: #{acmodel_forward.1} parent=1 // pred_fallthru
      _
    // Predicated region
    $region34: #{acmodel_forward.1} parent=1 // pred_check
      _
    $region35: #{acmodel_forward.1} parent=1 // pred_check_branch
      %60 = sbr.rel (0) target = $region37
    $region36: #{acmodel_forward.1} parent=1 // pred_region
      _
    $region37: #{acmodel_forward.1} parent=1 // pred_fallthru
      _
    // Predicated region
    $region38: #{acmodel_forward.1} parent=1 // pred_check
      _
    $region39: #{acmodel_forward.1} parent=1 // pred_check_branch
      %62 = sbr.rel (0) target = $region41
    $region40: #{acmodel_forward.1} parent=1 // pred_region
      %s64 = ssub.s32 2048, 2048
      %65 = vsyncadd [#allocation5], %s64
      %s66 = sshll.u32 [#allocation6], 4
      %s67 = int_to_ptr.vmem [resolvable:$true] %s66
      %72 = dma.hbm_to_vmem [thread:$0]  %s9, 2048, %s67, [#allocation5], 128, 128, 8
    $region41: #{acmodel_forward.1} parent=1 // pred_fallthru
      _
    // Predicated region
    $region42: #{acmodel_forward.1} parent=1 // pred_check
      _
    $region43: #{acmodel_forward.1} parent=1 // pred_check_branch
      %74 = sbr.rel (0) target = $region45
    $region44: #{acmodel_forward.1} parent=1 // pred_region
      _
    $region45: #{acmodel_forward.1} parent=1 // pred_fallthru
      _
    // Predicated region
    $region46: #{acmodel_forward.1} parent=1 // pred_check
      _
    $region47: #{acmodel_forward.1} parent=1 // pred_check_branch
      %76 = sbr.rel (0) target = $region49
    $region48: #{acmodel_forward.1} parent=1 // pred_region
      %s78 = ssub.s32 2048, 2048
      %79 = vsyncadd [#allocation8], %s78
      %s80 = sshll.u32 [#allocation7], 4
      %s81 = int_to_ptr.vmem [resolvable:$true] %s80
      %86 = dma.hbm_to_vmem [thread:$0]  %s11, 2048, %s81, [#allocation8], 64, 64, 4
    $region49: #{acmodel_forward.1} parent=1 // pred_fallthru
      _
    // Predicated region
    $region50: #{acmodel_forward.1} parent=1 // pred_check
      _
    $region51: #{acmodel_forward.1} parent=1 // pred_check_branch
      %88 = sbr.rel (0) target = $region53
    $region52: #{acmodel_forward.1} parent=1 // pred_region
      _
    $region53: #{acmodel_forward.1} parent=1 // pred_fallthru
      _
    // Predicated region
    $region54: #{acmodel_forward.1} parent=1 // pred_check
      _
    $region55: #{acmodel_forward.1} parent=1 // pred_check_branch
      %90 = sbr.rel (0) target = $region57
    $region56: #{acmodel_forward.1} parent=1 // pred_region
      %s92 = ssub.s32 1024, 1024
      %93 = vsyncadd [#allocation8], %s92
      %s94 = sshll.u32 [#allocation9], 4
      %s95 = int_to_ptr.vmem [resolvable:$true] %s94
      %100 = dma.hbm_to_vmem [thread:$0]  %s13, 1024, %s95, [#allocation8], 64, 64, 4
    $region57: #{acmodel_forward.1} parent=1 // pred_fallthru
      _
    // Predicated region
    $region58: #{acmodel_forward.1} parent=1 // pred_check
      _
    $region59: #{acmodel_forward.1} parent=1 // pred_check_branch
      %102 = sbr.rel (0) target = $region61
    $region60: #{acmodel_forward.1} parent=1 // pred_region
      _
    $region61: #{acmodel_forward.1} parent=1 // pred_fallthru
      _
    // Predicated region
    $region62: #{acmodel_forward.1} parent=1 // pred_check
      _
    $region63: #{acmodel_forward.1} parent=1 // pred_check_branch
      %104 = sbr.rel (0) target = $region65
    $region64: #{acmodel_forward.1} parent=1 // pred_region
      %105 = dma.done [#allocation3], 16384
    $region65: #{acmodel_forward.1} parent=1 // pred_fallthru
      _
    // Predicated region
    $region66: #{acmodel_forward.1} parent=1 // pred_check
      _
    $region67: #{acmodel_forward.1} parent=1 // pred_check_branch
      %107 = sbr.rel (0) target = $region69
    $region68: #{acmodel_forward.1} parent=1 // pred_region
      %108 = dma.done [#allocation5], 8192
    $region69: #{acmodel_forward.1} parent=1 // pred_fallthru
      _
    // Predicated region
    $region70: #{acmodel_forward.1} parent=1 // pred_check
      _
    $region71: #{acmodel_forward.1} parent=1 // pred_check_branch
      %110 = sbr.rel (0) target = $region73
    $region72: #{acmodel_forward.1} parent=1 // pred_region
      %111 = dma.done [#allocation5], 2048
    $region73: #{acmodel_forward.1} parent=1 // pred_fallthru
      _
    // Predicated region
    $region74: #{acmodel_forward.1} parent=1 // pred_check
      _
    $region75: #{acmodel_forward.1} parent=1 // pred_check_branch
      %113 = sbr.rel (0) target = $region77
    $region76: #{acmodel_forward.1} parent=1 // pred_region
      %114 = dma.done [#allocation8], 2048
    $region77: #{acmodel_forward.1} parent=1 // pred_fallthru
      _
    // Predicated region
    $region78: #{acmodel_forward.1} parent=1 // pred_check
      _
    $region79: #{acmodel_forward.1} parent=1 // pred_check_branch
      %116 = sbr.rel (0) target = $region81
    $region80: #{acmodel_forward.1} parent=1 // pred_region
      %117 = dma.done [#allocation8], 1024
    $region81: #{acmodel_forward.1} parent=1 // pred_fallthru
      _
    %v119 = vld [vmem:[%s0] sm:$0xff]
    %v120 = vld [vmem:[%s1] sm:$0xff]
    %v121 = vlaneseq
    %v122 = vand.u32 %v121, 127
    %123 = vset.pattern.permute.xlu0 0
    %124 = vperm.xlu0 %123, %v120
    %v125 = vpop.permute.xlu0 %124
    %vm126 = vcmp.eq.s32.totalorder %v122, %v125
    %v127 = vsel %vm126, 1, 0
    %v128 = vcvt.s32.f32 %v127
    %v129 = vpack.c.bf16 %v128, %v128
    %v130 = vld [vmem:[#allocation2] sm:$0xff]
    %v131 = vld [vmem:[#allocation2 + $0x8] sm:$0xff]
    %v132 = vld [vmem:[#allocation2 + $0x10] sm:$0xff]
    %v133 = vld [vmem:[#allocation2 + $0x18] sm:$0xff]
    %v134 = vld [vmem:[#allocation2 + $0x20] sm:$0xff]
    %v135 = vld [vmem:[#allocation2 + $0x28] sm:$0xff]
    %v136 = vld [vmem:[#allocation2 + $0x30] sm:$0xff]
    %v137 = vld [vmem:[#allocation2 + $0x38] sm:$0xff]
    %v138 = vld [vmem:[#allocation2 + $0x40] sm:$0xff]
    %v139 = vld [vmem:[#allocation2 + $0x48] sm:$0xff]
    %v140 = vld [vmem:[#allocation2 + $0x50] sm:$0xff]
    %v141 = vld [vmem:[#allocation2 + $0x58] sm:$0xff]
    %v142 = vld [vmem:[#allocation2 + $0x60] sm:$0xff]
    %v143 = vld [vmem:[#allocation2 + $0x68] sm:$0xff]
    %v144 = vld [vmem:[#allocation2 + $0x70] sm:$0xff]
    %v145 = vld [vmem:[#allocation2 + $0x78] sm:$0xff]
    %v146 = vld [vmem:[#allocation2 + $0x80] sm:$0xff]
    %v147 = vld [vmem:[#allocation2 + $0x88] sm:$0xff]
    %v148 = vld [vmem:[#allocation2 + $0x90] sm:$0xff]
    %v149 = vld [vmem:[#allocation2 + $0x98] sm:$0xff]
    %v150 = vld [vmem:[#allocation2 + $0xa0] sm:$0xff]
    %v151 = vld [vmem:[#allocation2 + $0xa8] sm:$0xff]
    %v152 = vld [vmem:[#allocation2 + $0xb0] sm:$0xff]
    %v153 = vld [vmem:[#allocation2 + $0xb8] sm:$0xff]
    %v154 = vld [vmem:[#allocation2 + $0xc0] sm:$0xff]
    %v155 = vld [vmem:[#allocation2 + $0xc8] sm:$0xff]
    %v156 = vld [vmem:[#allocation2 + $0xd0] sm:$0xff]
    %v157 = vld [vmem:[#allocation2 + $0xd8] sm:$0xff]
    %v158 = vld [vmem:[#allocation2 + $0xe0] sm:$0xff]
    %v159 = vld [vmem:[#allocation2 + $0xe8] sm:$0xff]
    %v160 = vld [vmem:[#allocation2 + $0xf0] sm:$0xff]
    %v161 = vld [vmem:[#allocation2 + $0xf8] sm:$0xff]
    %v162 = vld [vmem:[#allocation2 + $0x100] sm:$0xff]
    %v163 = vld [vmem:[#allocation2 + $0x108] sm:$0xff]
    %v164 = vld [vmem:[#allocation2 + $0x110] sm:$0xff]
    %v165 = vld [vmem:[#allocation2 + $0x118] sm:$0xff]
    %v166 = vld [vmem:[#allocation2 + $0x120] sm:$0xff]
    %v167 = vld [vmem:[#allocation2 + $0x128] sm:$0xff]
    %v168 = vld [vmem:[#allocation2 + $0x130] sm:$0xff]
    %v169 = vld [vmem:[#allocation2 + $0x138] sm:$0xff]
    %v170 = vld [vmem:[#allocation2 + $0x140] sm:$0xff]
    %v171 = vld [vmem:[#allocation2 + $0x148] sm:$0xff]
    %v172 = vld [vmem:[#allocation2 + $0x150] sm:$0xff]
    %v173 = vld [vmem:[#allocation2 + $0x158] sm:$0xff]
    %v174 = vld [vmem:[#allocation2 + $0x160] sm:$0xff]
    %v175 = vld [vmem:[#allocation2 + $0x168] sm:$0xff]
    %v176 = vld [vmem:[#allocation2 + $0x170] sm:$0xff]
    %v177 = vld [vmem:[#allocation2 + $0x178] sm:$0xff]
    %v178 = vld [vmem:[#allocation2 + $0x180] sm:$0xff]
    %v179 = vld [vmem:[#allocation2 + $0x188] sm:$0xff]
    %v180 = vld [vmem:[#allocation2 + $0x190] sm:$0xff]
    %v181 = vld [vmem:[#allocation2 + $0x198] sm:$0xff]
    %v182 = vld [vmem:[#allocation2 + $0x1a0] sm:$0xff]
    %v183 = vld [vmem:[#allocation2 + $0x1a8] sm:$0xff]
    %v184 = vld [vmem:[#allocation2 + $0x1b0] sm:$0xff]
    %v185 = vld [vmem:[#allocation2 + $0x1b8] sm:$0xff]
    %v186 = vld [vmem:[#allocation2 + $0x1c0] sm:$0xff]
    %v187 = vld [vmem:[#allocation2 + $0x1c8] sm:$0xff]
    %v188 = vld [vmem:[#allocation2 + $0x1d0] sm:$0xff]
    %v189 = vld [vmem:[#allocation2 + $0x1d8] sm:$0xff]
    %v190 = vld [vmem:[#allocation2 + $0x1e0] sm:$0xff]
    %v191 = vld [vmem:[#allocation2 + $0x1e8] sm:$0xff]
    %v192 = vld [vmem:[#allocation2 + $0x1f0] sm:$0xff]
    %v193 = vld [vmem:[#allocation2 + $0x1f8] sm:$0xff]
    %v194 = vld [vmem:[#allocation2 + $0x200] sm:$0xff]
    %v195 = vld [vmem:[#allocation2 + $0x208] sm:$0xff]
    %v196 = vld [vmem:[#allocation2 + $0x210] sm:$0xff]
    %v197 = vld [vmem:[#allocation2 + $0x218] sm:$0xff]
    %v198 = vld [vmem:[#allocation2 + $0x220] sm:$0xff]
    %v199 = vld [vmem:[#allocation2 + $0x228] sm:$0xff]
    %v200 = vld [vmem:[#allocation2 + $0x230] sm:$0xff]
    %v201 = vld [vmem:[#allocation2 + $0x238] sm:$0xff]
    %v202 = vld [vmem:[#allocation2 + $0x240] sm:$0xff]
    %v203 = vld [vmem:[#allocation2 + $0x248] sm:$0xff]
    %v204 = vld [vmem:[#allocation2 + $0x250] sm:$0xff]
    %v205 = vld [vmem:[#allocation2 + $0x258] sm:$0xff]
    %v206 = vld [vmem:[#allocation2 + $0x260] sm:$0xff]
    %v207 = vld [vmem:[#allocation2 + $0x268] sm:$0xff]
    %v208 = vld [vmem:[#allocation2 + $0x270] sm:$0xff]
    %v209 = vld [vmem:[#allocation2 + $0x278] sm:$0xff]
    %v210 = vld [vmem:[#allocation2 + $0x280] sm:$0xff]
    %v211 = vld [vmem:[#allocation2 + $0x288] sm:$0xff]
    %v212 = vld [vmem:[#allocation2 + $0x290] sm:$0xff]
    %v213 = vld [vmem:[#allocation2 + $0x298] sm:$0xff]
    %v214 = vld [vmem:[#allocation2 + $0x2a0] sm:$0xff]
    %v215 = vld [vmem:[#allocation2 + $0x2a8] sm:$0xff]
    %v216 = vld [vmem:[#allocation2 + $0x2b0] sm:$0xff]
    %v217 = vld [vmem:[#allocation2 + $0x2b8] sm:$0xff]
    %v218 = vld [vmem:[#allocation2 + $0x2c0] sm:$0xff]
    %v219 = vld [vmem:[#allocation2 + $0x2c8] sm:$0xff]
    %v220 = vld [vmem:[#allocation2 + $0x2d0] sm:$0xff]
    %v221 = vld [vmem:[#allocation2 + $0x2d8] sm:$0xff]
    %v222 = vld [vmem:[#allocation2 + $0x2e0] sm:$0xff]
    %v223 = vld [vmem:[#allocation2 + $0x2e8] sm:$0xff]
    %v224 = vld [vmem:[#allocation2 + $0x2f0] sm:$0xff]
    %v225 = vld [vmem:[#allocation2 + $0x2f8] sm:$0xff]
    %v226 = vld [vmem:[#allocation2 + $0x300] sm:$0xff]
    %v227 = vld [vmem:[#allocation2 + $0x308] sm:$0xff]
    %v228 = vld [vmem:[#allocation2 + $0x310] sm:$0xff]
    %v229 = vld [vmem:[#allocation2 + $0x318] sm:$0xff]
    %v230 = vld [vmem:[#allocation2 + $0x320] sm:$0xff]
    %v231 = vld [vmem:[#allocation2 + $0x328] sm:$0xff]
    %v232 = vld [vmem:[#allocation2 + $0x330] sm:$0xff]
    %v233 = vld [vmem:[#allocation2 + $0x338] sm:$0xff]
    %v234 = vld [vmem:[#allocation2 + $0x340] sm:$0xff]
    %v235 = vld [vmem:[#allocation2 + $0x348] sm:$0xff]
    %v236 = vld [vmem:[#allocation2 + $0x350] sm:$0xff]
    %v237 = vld [vmem:[#allocation2 + $0x358] sm:$0xff]
    %v238 = vld [vmem:[#allocation2 + $0x360] sm:$0xff]
    %v239 = vld [vmem:[#allocation2 + $0x368] sm:$0xff]
    %v240 = vld [vmem:[#allocation2 + $0x370] sm:$0xff]
    %v241 = vld [vmem:[#allocation2 + $0x378] sm:$0xff]
    %v242 = vld [vmem:[#allocation2 + $0x380] sm:$0xff]
    %v243 = vld [vmem:[#allocation2 + $0x388] sm:$0xff]
    %v244 = vld [vmem:[#allocation2 + $0x390] sm:$0xff]
    %v245 = vld [vmem:[#allocation2 + $0x398] sm:$0xff]
    %v246 = vld [vmem:[#allocation2 + $0x3a0] sm:$0xff]
    %v247 = vld [vmem:[#allocation2 + $0x3a8] sm:$0xff]
    %v248 = vld [vmem:[#allocation2 + $0x3b0] sm:$0xff]
    %v249 = vld [vmem:[#allocation2 + $0x3b8] sm:$0xff]
    %v250 = vld [vmem:[#allocation2 + $0x3c0] sm:$0xff]
    %v251 = vld [vmem:[#allocation2 + $0x3c8] sm:$0xff]
    %v252 = vld [vmem:[#allocation2 + $0x3d0] sm:$0xff]
    %v253 = vld [vmem:[#allocation2 + $0x3d8] sm:$0xff]
    %v254 = vld [vmem:[#allocation2 + $0x3e0] sm:$0xff]
    %v255 = vld [vmem:[#allocation2 + $0x3e8] sm:$0xff]
    %v256 = vld [vmem:[#allocation2 + $0x3f0] sm:$0xff]
    %v257 = vld [vmem:[#allocation2 + $0x3f8] sm:$0xff]
    %v258 = vld [vmem:[#allocation4] sm:$0xff]
    %v259 = vld [vmem:[#allocation4 + $0x8] sm:$0xff]
    %v260 = vld [vmem:[#allocation4 + $0x10] sm:$0xff]
    %v261 = vld [vmem:[#allocation4 + $0x18] sm:$0xff]
    %v262 = vld [vmem:[#allocation4 + $0x20] sm:$0xff]
    %v263 = vld [vmem:[#allocation4 + $0x28] sm:$0xff]
    %v264 = vld [vmem:[#allocation4 + $0x30] sm:$0xff]
    %v265 = vld [vmem:[#allocation4 + $0x38] sm:$0xff]
    %v266 = vld [vmem:[#allocation4 + $0x40] sm:$0xff]
    %v267 = vld [vmem:[#allocation4 + $0x48] sm:$0xff]
    %v268 = vld [vmem:[#allocation4 + $0x50] sm:$0xff]
    %v269 = vld [vmem:[#allocation4 + $0x58] sm:$0xff]
    %v270 = vld [vmem:[#allocation4 + $0x60] sm:$0xff]
    %v271 = vld [vmem:[#allocation4 + $0x68] sm:$0xff]
    %v272 = vld [vmem:[#allocation4 + $0x70] sm:$0xff]
    %v273 = vld [vmem:[#allocation4 + $0x78] sm:$0xff]
    %v274 = vld [vmem:[#allocation4 + $0x80] sm:$0xff]
    %v275 = vld [vmem:[#allocation4 + $0x88] sm:$0xff]
    %v276 = vld [vmem:[#allocation4 + $0x90] sm:$0xff]
    %v277 = vld [vmem:[#allocation4 + $0x98] sm:$0xff]
    %v278 = vld [vmem:[#allocation4 + $0xa0] sm:$0xff]
    %v279 = vld [vmem:[#allocation4 + $0xa8] sm:$0xff]
    %v280 = vld [vmem:[#allocation4 + $0xb0] sm:$0xff]
    %v281 = vld [vmem:[#allocation4 + $0xb8] sm:$0xff]
    %v282 = vld [vmem:[#allocation4 + $0xc0] sm:$0xff]
    %v283 = vld [vmem:[#allocation4 + $0xc8] sm:$0xff]
    %v284 = vld [vmem:[#allocation4 + $0xd0] sm:$0xff]
    %v285 = vld [vmem:[#allocation4 + $0xd8] sm:$0xff]
    %v286 = vld [vmem:[#allocation4 + $0xe0] sm:$0xff]
    %v287 = vld [vmem:[#allocation4 + $0xe8] sm:$0xff]
    %v288 = vld [vmem:[#allocation4 + $0xf0] sm:$0xff]
    %v289 = vld [vmem:[#allocation4 + $0xf8] sm:$0xff]
    %v290 = vld [vmem:[#allocation4 + $0x100] sm:$0xff]
    %v291 = vld [vmem:[#allocation4 + $0x108] sm:$0xff]
    %v292 = vld [vmem:[#allocation4 + $0x110] sm:$0xff]
    %v293 = vld [vmem:[#allocation4 + $0x118] sm:$0xff]
    %v294 = vld [vmem:[#allocation4 + $0x120] sm:$0xff]
    %v295 = vld [vmem:[#allocation4 + $0x128] sm:$0xff]
    %v296 = vld [vmem:[#allocation4 + $0x130] sm:$0xff]
    %v297 = vld [vmem:[#allocation4 + $0x138] sm:$0xff]
    %v298 = vld [vmem:[#allocation4 + $0x140] sm:$0xff]
    %v299 = vld [vmem:[#allocation4 + $0x148] sm:$0xff]
    %v300 = vld [vmem:[#allocation4 + $0x150] sm:$0xff]
    %v301 = vld [vmem:[#allocation4 + $0x158] sm:$0xff]
    %v302 = vld [vmem:[#allocation4 + $0x160] sm:$0xff]
    %v303 = vld [vmem:[#allocation4 + $0x168] sm:$0xff]
    %v304 = vld [vmem:[#allocation4 + $0x170] sm:$0xff]
    %v305 = vld [vmem:[#allocation4 + $0x178] sm:$0xff]
    %v306 = vld [vmem:[#allocation4 + $0x180] sm:$0xff]
    %v307 = vld [vmem:[#allocation4 + $0x188] sm:$0xff]
    %v308 = vld [vmem:[#allocation4 + $0x190] sm:$0xff]
    %v309 = vld [vmem:[#allocation4 + $0x198] sm:$0xff]
    %v310 = vld [vmem:[#allocation4 + $0x1a0] sm:$0xff]
    %v311 = vld [vmem:[#allocation4 + $0x1a8] sm:$0xff]
    %v312 = vld [vmem:[#allocation4 + $0x1b0] sm:$0xff]
    %v313 = vld [vmem:[#allocation4 + $0x1b8] sm:$0xff]
    %v314 = vld [vmem:[#allocation4 + $0x1c0] sm:$0xff]
    %v315 = vld [vmem:[#allocation4 + $0x1c8] sm:$0xff]
    %v316 = vld [vmem:[#allocation4 + $0x1d0] sm:$0xff]
    %v317 = vld [vmem:[#allocation4 + $0x1d8] sm:$0xff]
    %v318 = vld [vmem:[#allocation4 + $0x1e0] sm:$0xff]
    %v319 = vld [vmem:[#allocation4 + $0x1e8] sm:$0xff]
    %v320 = vld [vmem:[#allocation4 + $0x1f0] sm:$0xff]
    %v321 = vld [vmem:[#allocation4 + $0x1f8] sm:$0xff]
    %v386 = vunpack.c.l.b16 %v258
    %v387 = vunpack.c.h.b16 %v258
    %v388 = vunpack.c.l.b16 %v259
    %v389 = vunpack.c.h.b16 %v259
    %v390 = vunpack.c.l.b16 %v260
    %v391 = vunpack.c.h.b16 %v260
    %v392 = vunpack.c.l.b16 %v261
    %v393 = vunpack.c.h.b16 %v261
    %v394 = vunpack.c.l.b16 %v262
    %v395 = vunpack.c.h.b16 %v262
    %v396 = vunpack.c.l.b16 %v263
    %v397 = vunpack.c.h.b16 %v263
    %v398 = vunpack.c.l.b16 %v264
    %v399 = vunpack.c.h.b16 %v264
    %v400 = vunpack.c.l.b16 %v265
    %v401 = vunpack.c.h.b16 %v265
    %v402 = vunpack.c.l.b16 %v266
    %v403 = vunpack.c.h.b16 %v266
    %v404 = vunpack.c.l.b16 %v267
    %v405 = vunpack.c.h.b16 %v267
    %v406 = vunpack.c.l.b16 %v268
    %v407 = vunpack.c.h.b16 %v268
    %v408 = vunpack.c.l.b16 %v269
    %v409 = vunpack.c.h.b16 %v269
    %v410 = vunpack.c.l.b16 %v270
    %v411 = vunpack.c.h.b16 %v270
    %v412 = vunpack.c.l.b16 %v271
    %v413 = vunpack.c.h.b16 %v271
    %v414 = vunpack.c.l.b16 %v272
    %v415 = vunpack.c.h.b16 %v272
    %v416 = vunpack.c.l.b16 %v273
    %v417 = vunpack.c.h.b16 %v273
    %v418 = vunpack.c.l.b16 %v274
    %v419 = vunpack.c.h.b16 %v274
    %v420 = vunpack.c.l.b16 %v275
    %v421 = vunpack.c.h.b16 %v275
    %v422 = vunpack.c.l.b16 %v276
    %v423 = vunpack.c.h.b16 %v276
    %v424 = vunpack.c.l.b16 %v277
    %v425 = vunpack.c.h.b16 %v277
    %v426 = vunpack.c.l.b16 %v278
    %v427 = vunpack.c.h.b16 %v278
    %v428 = vunpack.c.l.b16 %v279
    %v429 = vunpack.c.h.b16 %v279
    %v430 = vunpack.c.l.b16 %v280
    %v431 = vunpack.c.h.b16 %v280
    %v432 = vunpack.c.l.b16 %v281
    %v433 = vunpack.c.h.b16 %v281
    %v434 = vunpack.c.l.b16 %v282
    %v435 = vunpack.c.h.b16 %v282
    %v436 = vunpack.c.l.b16 %v283
    %v437 = vunpack.c.h.b16 %v283
    %v438 = vunpack.c.l.b16 %v284
    %v439 = vunpack.c.h.b16 %v284
    %v440 = vunpack.c.l.b16 %v285
    %v441 = vunpack.c.h.b16 %v285
    %v442 = vunpack.c.l.b16 %v286
    %v443 = vunpack.c.h.b16 %v286
    %v444 = vunpack.c.l.b16 %v287
    %v445 = vunpack.c.h.b16 %v287
    %v446 = vunpack.c.l.b16 %v288
    %v447 = vunpack.c.h.b16 %v288
    %v448 = vunpack.c.l.b16 %v289
    %v449 = vunpack.c.h.b16 %v289
    %v450 = vunpack.c.l.b16 %v290
    %v451 = vunpack.c.h.b16 %v290
    %v452 = vunpack.c.l.b16 %v291
    %v453 = vunpack.c.h.b16 %v291
    %v454 = vunpack.c.l.b16 %v292
    %v455 = vunpack.c.h.b16 %v292
    %v456 = vunpack.c.l.b16 %v293
    %v457 = vunpack.c.h.b16 %v293
    %v458 = vunpack.c.l.b16 %v294
    %v459 = vunpack.c.h.b16 %v294
    %v460 = vunpack.c.l.b16 %v295
    %v461 = vunpack.c.h.b16 %v295
    %v462 = vunpack.c.l.b16 %v296
    %v463 = vunpack.c.h.b16 %v296
    %v464 = vunpack.c.l.b16 %v297
    %v465 = vunpack.c.h.b16 %v297
    %v466 = vunpack.c.l.b16 %v298
    %v467 = vunpack.c.h.b16 %v298
    %v468 = vunpack.c.l.b16 %v299
    %v469 = vunpack.c.h.b16 %v299
    %v470 = vunpack.c.l.b16 %v300
    %v471 = vunpack.c.h.b16 %v300
    %v472 = vunpack.c.l.b16 %v301
    %v473 = vunpack.c.h.b16 %v301
    %v474 = vunpack.c.l.b16 %v302
    %v475 = vunpack.c.h.b16 %v302
    %v476 = vunpack.c.l.b16 %v303
    %v477 = vunpack.c.h.b16 %v303
    %v478 = vunpack.c.l.b16 %v304
    %v479 = vunpack.c.h.b16 %v304
    %v480 = vunpack.c.l.b16 %v305
    %v481 = vunpack.c.h.b16 %v305
    %v482 = vunpack.c.l.b16 %v306
    %v483 = vunpack.c.h.b16 %v306
    %v484 = vunpack.c.l.b16 %v307
    %v485 = vunpack.c.h.b16 %v307
    %v486 = vunpack.c.l.b16 %v308
    %v487 = vunpack.c.h.b16 %v308
    %v488 = vunpack.c.l.b16 %v309
    %v489 = vunpack.c.h.b16 %v309
    %v490 = vunpack.c.l.b16 %v310
    %v491 = vunpack.c.h.b16 %v310
    %v492 = vunpack.c.l.b16 %v311
    %v493 = vunpack.c.h.b16 %v311
    %v494 = vunpack.c.l.b16 %v312
    %v495 = vunpack.c.h.b16 %v312
    %v496 = vunpack.c.l.b16 %v313
    %v497 = vunpack.c.h.b16 %v313
    %v498 = vunpack.c.l.b16 %v314
    %v499 = vunpack.c.h.b16 %v314
    %v500 = vunpack.c.l.b16 %v315
    %v501 = vunpack.c.h.b16 %v315
    %v502 = vunpack.c.l.b16 %v316
    %v503 = vunpack.c.h.b16 %v316
    %v504 = vunpack.c.l.b16 %v317
    %v505 = vunpack.c.h.b16 %v317
    %v506 = vunpack.c.l.b16 %v318
    %v507 = vunpack.c.h.b16 %v318
    %v508 = vunpack.c.l.b16 %v319
    %v509 = vunpack.c.h.b16 %v319
    %v510 = vunpack.c.l.b16 %v320
    %v511 = vunpack.c.h.b16 %v320
    %v512 = vunpack.c.l.b16 %v321
    %v513 = vunpack.c.h.b16 %v321
    %v514 = vpack.c.b16 %v394, %v386
    %v515 = vpack.c.b16 %v395, %v387
    %v516 = vpack.c.b16 %v396, %v388
    %v517 = vpack.c.b16 %v397, %v389
    %v518 = vpack.c.b16 %v398, %v390
    %v519 = vpack.c.b16 %v399, %v391
    %v520 = vpack.c.b16 %v400, %v392
    %v521 = vpack.c.b16 %v401, %v393
    %v522 = vpack.c.b16 %v410, %v402
    %v523 = vpack.c.b16 %v411, %v403
    %v524 = vpack.c.b16 %v412, %v404
    %v525 = vpack.c.b16 %v413, %v405
    %v526 = vpack.c.b16 %v414, %v406
    %v527 = vpack.c.b16 %v415, %v407
    %v528 = vpack.c.b16 %v416, %v408
    %v529 = vpack.c.b16 %v417, %v409
    %v530 = vpack.c.b16 %v426, %v418
    %v531 = vpack.c.b16 %v427, %v419
    %v532 = vpack.c.b16 %v428, %v420
    %v533 = vpack.c.b16 %v429, %v421
    %v534 = vpack.c.b16 %v430, %v422
    %v535 = vpack.c.b16 %v431, %v423
    %v536 = vpack.c.b16 %v432, %v424
    %v537 = vpack.c.b16 %v433, %v425
    %v538 = vpack.c.b16 %v442, %v434
    %v539 = vpack.c.b16 %v443, %v435
    %v540 = vpack.c.b16 %v444, %v436
    %v541 = vpack.c.b16 %v445, %v437
    %v542 = vpack.c.b16 %v446, %v438
    %v543 = vpack.c.b16 %v447, %v439
    %v544 = vpack.c.b16 %v448, %v440
    %v545 = vpack.c.b16 %v449, %v441
    %v546 = vpack.c.b16 %v458, %v450
    %v547 = vpack.c.b16 %v459, %v451
    %v548 = vpack.c.b16 %v460, %v452
    %v549 = vpack.c.b16 %v461, %v453
    %v550 = vpack.c.b16 %v462, %v454
    %v551 = vpack.c.b16 %v463, %v455
    %v552 = vpack.c.b16 %v464, %v456
    %v553 = vpack.c.b16 %v465, %v457
    %v554 = vpack.c.b16 %v474, %v466
    %v555 = vpack.c.b16 %v475, %v467
    %v556 = vpack.c.b16 %v476, %v468
    %v557 = vpack.c.b16 %v477, %v469
    %v558 = vpack.c.b16 %v478, %v470
    %v559 = vpack.c.b16 %v479, %v471
    %v560 = vpack.c.b16 %v480, %v472
    %v561 = vpack.c.b16 %v481, %v473
    %v562 = vpack.c.b16 %v490, %v482
    %v563 = vpack.c.b16 %v491, %v483
    %v564 = vpack.c.b16 %v492, %v484
    %v565 = vpack.c.b16 %v493, %v485
    %v566 = vpack.c.b16 %v494, %v486
    %v567 = vpack.c.b16 %v495, %v487
    %v568 = vpack.c.b16 %v496, %v488
    %v569 = vpack.c.b16 %v497, %v489
    %v570 = vpack.c.b16 %v506, %v498
    %v571 = vpack.c.b16 %v507, %v499
    %v572 = vpack.c.b16 %v508, %v500
    %v573 = vpack.c.b16 %v509, %v501
    %v574 = vpack.c.b16 %v510, %v502
    %v575 = vpack.c.b16 %v511, %v503
    %v576 = vpack.c.b16 %v512, %v504
    %v577 = vpack.c.b16 %v513, %v505
    %642 = vmatprep.subr.bf16.mxu0 %v515
    %643 = vmatpush1.bf16.msra.mxu0 %v514
    %644 = vmatprep.subr.bf16.mxu0 %v523
    %645 = vmatpush1.bf16.msra.mxu0 %v522
    %646 = vmatprep.subr.bf16.mxu0 %v531
    %647 = vmatpush1.bf16.msra.mxu0 %v530
    %648 = vmatprep.subr.bf16.mxu0 %v539
    %649 = vmatpush1.bf16.msra.mxu0 %v538
    %650 = vmatprep.subr.bf16.mxu0 %v547
    %651 = vmatpush1.bf16.msra.mxu0 %v546
    %652 = vmatprep.subr.bf16.mxu0 %v555
    %653 = vmatpush1.bf16.msra.mxu0 %v554
    %654 = vmatprep.subr.bf16.mxu0 %v563
    %655 = vmatpush1.bf16.msra.mxu0 %v562
    %656 = vmatprep.subr.bf16.mxu0 %v571
    %657 = vmatpush1.bf16.msra.mxu0 %v570
    %658 = vmatprep.subr.bf16.mxu0 0
    %659 = vmatpush1.bf16.msra.mxu0 0
    %660 = vmatprep.subr.bf16.mxu0 0
    %661 = vmatpush1.bf16.msra.mxu0 0
    %662 = vmatprep.subr.bf16.mxu0 0
    %663 = vmatpush1.bf16.msra.mxu0 0
    %664 = vmatprep.subr.bf16.mxu0 0
    %665 = vmatpush1.bf16.msra.mxu0 0
    %666 = vmatprep.subr.bf16.mxu0 0
    %667 = vmatpush1.bf16.msra.mxu0 0
    %668 = vmatprep.subr.bf16.mxu0 0
    %669 = vmatpush1.bf16.msra.mxu0 0
    %670 = vmatprep.subr.bf16.mxu0 0
    %671 = vmatpush1.bf16.msra.mxu0 0
    %672 = vmatprep.subr.bf16.mxu0 0
    %673 = vmatpush1.bf16.msra.mxu0 0
    %674 = vmatprep.mubr.bf16.mxu0 0
    %675 = vmatmul.mubr.bf16.gmra.mrb[0].mxu0 %v129
    %v676 = vpop.f32.mrb[0].mxu0
    %v677 = vadd.f32 0.0, %v676
    %v678 = vpop.f32.mrb[0].mxu0
    %v679 = vadd.f32 0.0, %v678
    %v680 = vpop.f32.mrb[0].mxu0
    %v681 = vpop.f32.mrb[0].mxu0
    %682 = vdwg.mxu0
    %683 = vmatprep.subr.bf16.mxu0 %v517
    %684 = vmatpush1.bf16.msra.mxu0 %v516
    %685 = vmatprep.subr.bf16.mxu0 %v525
    %686 = vmatpush1.bf16.msra.mxu0 %v524
    %687 = vmatprep.subr.bf16.mxu0 %v533
    %688 = vmatpush1.bf16.msra.mxu0 %v532
    %689 = vmatprep.subr.bf16.mxu0 %v541
    %690 = vmatpush1.bf16.msra.mxu0 %v540
    %691 = vmatprep.subr.bf16.mxu0 %v549
    %692 = vmatpush1.bf16.msra.mxu0 %v548
    %693 = vmatprep.subr.bf16.mxu0 %v557
    %694 = vmatpush1.bf16.msra.mxu0 %v556
    %695 = vmatprep.subr.bf16.mxu0 %v565
    %696 = vmatpush1.bf16.msra.mxu0 %v564
    %697 = vmatprep.subr.bf16.mxu0 %v573
    %698 = vmatpush1.bf16.msra.mxu0 %v572
    %699 = vmatprep.subr.bf16.mxu0 0
    %700 = vmatpush1.bf16.msra.mxu0 0
    %701 = vmatprep.subr.bf16.mxu0 0
    %702 = vmatpush1.bf16.msra.mxu0 0
    %703 = vmatprep.subr.bf16.mxu0 0
    %704 = vmatpush1.bf16.msra.mxu0 0
    %705 = vmatprep.subr.bf16.mxu0 0
    %706 = vmatpush1.bf16.msra.mxu0 0
    %707 = vmatprep.subr.bf16.mxu0 0
    %708 = vmatpush1.bf16.msra.mxu0 0
    %709 = vmatprep.subr.bf16.mxu0 0
    %710 = vmatpush1.bf16.msra.mxu0 0
    %711 = vmatprep.subr.bf16.mxu0 0
    %712 = vmatpush1.bf16.msra.mxu0 0
    %713 = vmatprep.subr.bf16.mxu0 0
    %714 = vmatpush1.bf16.msra.mxu0 0
    %715 = vmatprep.mubr.bf16.mxu0 0
    %716 = vmatmul.mubr.bf16.gmra.mrb[0].mxu0 %v129
    %v717 = vpop.f32.mrb[0].mxu0
    %v718 = vadd.f32 0.0, %v717
    %v719 = vpop.f32.mrb[0].mxu0
    %v720 = vadd.f32 0.0, %v719
    %v721 = vpop.f32.mrb[0].mxu0
    %v722 = vpop.f32.mrb[0].mxu0
    %723 = vdwg.mxu0
    %724 = vmatprep.subr.bf16.mxu0 %v519
    %725 = vmatpush1.bf16.msra.mxu0 %v518
    %726 = vmatprep.subr.bf16.mxu0 %v527
    %727 = vmatpush1.bf16.msra.mxu0 %v526
    %728 = vmatprep.subr.bf16.mxu0 %v535
    %729 = vmatpush1.bf16.msra.mxu0 %v534
    %730 = vmatprep.subr.bf16.mxu0 %v543
    %731 = vmatpush1.bf16.msra.mxu0 %v542
    %732 = vmatprep.subr.bf16.mxu0 %v551
    %733 = vmatpush1.bf16.msra.mxu0 %v550
    %734 = vmatprep.subr.bf16.mxu0 %v559
    %735 = vmatpush1.bf16.msra.mxu0 %v558
    %736 = vmatprep.subr.bf16.mxu0 %v567
    %737 = vmatpush1.bf16.msra.mxu0 %v566
    %738 = vmatprep.subr.bf16.mxu0 %v575
    %739 = vmatpush1.bf16.msra.mxu0 %v574
    %740 = vmatprep.subr.bf16.mxu0 0
    %741 = vmatpush1.bf16.msra.mxu0 0
    %742 = vmatprep.subr.bf16.mxu0 0
    %743 = vmatpush1.bf16.msra.mxu0 0
    %744 = vmatprep.subr.bf16.mxu0 0
    %745 = vmatpush1.bf16.msra.mxu0 0
    %746 = vmatprep.subr.bf16.mxu0 0
    %747 = vmatpush1.bf16.msra.mxu0 0
    %748 = vmatprep.subr.bf16.mxu0 0
    %749 = vmatpush1.bf16.msra.mxu0 0
    %750 = vmatprep.subr.bf16.mxu0 0
    %751 = vmatpush1.bf16.msra.mxu0 0
    %752 = vmatprep.subr.bf16.mxu0 0
    %753 = vmatpush1.bf16.msra.mxu0 0
    %754 = vmatprep.subr.bf16.mxu0 0
    %755 = vmatpush1.bf16.msra.mxu0 0
    %756 = vmatprep.mubr.bf16.mxu0 0
    %757 = vmatmul.mubr.bf16.gmra.mrb[0].mxu0 %v129
    %v758 = vpop.f32.mrb[0].mxu0
    %v759 = vadd.f32 0.0, %v758
    %v760 = vpop.f32.mrb[0].mxu0
    %v761 = vadd.f32 0.0, %v760
    %v762 = vpop.f32.mrb[0].mxu0
    %v763 = vpop.f32.mrb[0].mxu0
    %764 = vdwg.mxu0
    %765 = vmatprep.subr.bf16.mxu0 %v521
    %766 = vmatpush1.bf16.msra.mxu0 %v520
    %767 = vmatprep.subr.bf16.mxu0 %v529
    %768 = vmatpush1.bf16.msra.mxu0 %v528
    %769 = vmatprep.subr.bf16.mxu0 %v537
    %770 = vmatpush1.bf16.msra.mxu0 %v536
    %771 = vmatprep.subr.bf16.mxu0 %v545
    %772 = vmatpush1.bf16.msra.mxu0 %v544
    %773 = vmatprep.subr.bf16.mxu0 %v553
    %774 = vmatpush1.bf16.msra.mxu0 %v552
    %775 = vmatprep.subr.bf16.mxu0 %v561
    %776 = vmatpush1.bf16.msra.mxu0 %v560
    %777 = vmatprep.subr.bf16.mxu0 %v569
    %778 = vmatpush1.bf16.msra.mxu0 %v568
    %779 = vmatprep.subr.bf16.mxu0 %v577
    %780 = vmatpush1.bf16.msra.mxu0 %v576
    %781 = vmatprep.subr.bf16.mxu0 0
    %782 = vmatpush1.bf16.msra.mxu0 0
    %783 = vmatprep.subr.bf16.mxu0 0
    %784 = vmatpush1.bf16.msra.mxu0 0
    %785 = vmatprep.subr.bf16.mxu0 0
    %786 = vmatpush1.bf16.msra.mxu0 0
    %787 = vmatprep.subr.bf16.mxu0 0
    %788 = vmatpush1.bf16.msra.mxu0 0
    %789 = vmatprep.subr.bf16.mxu0 0
    %790 = vmatpush1.bf16.msra.mxu0 0
    %791 = vmatprep.subr.bf16.mxu0 0
    %792 = vmatpush1.bf16.msra.mxu0 0
    %793 = vmatprep.subr.bf16.mxu0 0
    %794 = vmatpush1.bf16.msra.mxu0 0
    %795 = vmatprep.subr.bf16.mxu0 0
    %796 = vmatpush1.bf16.msra.mxu0 0
    %797 = vmatprep.mubr.bf16.mxu0 0
    %798 = vmatmul.mubr.bf16.gmra.mrb[0].mxu0 %v129
    %v799 = vpop.f32.mrb[0].mxu0
    %v800 = vadd.f32 0.0, %v799
    %v801 = vpop.f32.mrb[0].mxu0
    %v802 = vadd.f32 0.0, %v801
    %v803 = vpop.f32.mrb[0].mxu0
    %v804 = vpop.f32.mrb[0].mxu0
    %805 = vdwg.mxu0
    %v807 = vunpack.c.l.b16 %v119
    %v808 = vunpack.c.h.b16 %v119
    %v809 = vpack.c.b16 %v807, %v807
    %v810 = vpack.c.b16 %v808, %v808
    %v941 = vunpack.c.l.b16 %v130
    %v942 = vunpack.c.h.b16 %v130
    %v943 = vunpack.c.l.b16 %v131
    %v944 = vunpack.c.h.b16 %v131
    %v945 = vunpack.c.l.b16 %v132
    %v946 = vunpack.c.h.b16 %v132
    %v947 = vunpack.c.l.b16 %v133
    %v948 = vunpack.c.h.b16 %v133
    %v949 = vunpack.c.l.b16 %v134
    %v950 = vunpack.c.h.b16 %v134
    %v951 = vunpack.c.l.b16 %v135
    %v952 = vunpack.c.h.b16 %v135
    %v953 = vunpack.c.l.b16 %v136
    %v954 = vunpack.c.h.b16 %v136
    %v955 = vunpack.c.l.b16 %v137
    %v956 = vunpack.c.h.b16 %v137
    %v957 = vunpack.c.l.b16 %v138
    %v958 = vunpack.c.h.b16 %v138
    %v959 = vunpack.c.l.b16 %v139
    %v960 = vunpack.c.h.b16 %v139
    %v961 = vunpack.c.l.b16 %v140
    %v962 = vunpack.c.h.b16 %v140
    %v963 = vunpack.c.l.b16 %v141
    %v964 = vunpack.c.h.b16 %v141
    %v965 = vunpack.c.l.b16 %v142
    %v966 = vunpack.c.h.b16 %v142
    %v967 = vunpack.c.l.b16 %v143
    %v968 = vunpack.c.h.b16 %v143
    %v969 = vunpack.c.l.b16 %v144
    %v970 = vunpack.c.h.b16 %v144
    %v971 = vunpack.c.l.b16 %v145
    %v972 = vunpack.c.h.b16 %v145
    %v973 = vunpack.c.l.b16 %v146
    %v974 = vunpack.c.h.b16 %v146
    %v975 = vunpack.c.l.b16 %v147
    %v976 = vunpack.c.h.b16 %v147
    %v977 = vunpack.c.l.b16 %v148
    %v978 = vunpack.c.h.b16 %v148
    %v979 = vunpack.c.l.b16 %v149
    %v980 = vunpack.c.h.b16 %v149
    %v981 = vunpack.c.l.b16 %v150
    %v982 = vunpack.c.h.b16 %v150
    %v983 = vunpack.c.l.b16 %v151
    %v984 = vunpack.c.h.b16 %v151
    %v985 = vunpack.c.l.b16 %v152
    %v986 = vunpack.c.h.b16 %v152
    %v987 = vunpack.c.l.b16 %v153
    %v988 = vunpack.c.h.b16 %v153
    %v989 = vunpack.c.l.b16 %v154
    %v990 = vunpack.c.h.b16 %v154
    %v991 = vunpack.c.l.b16 %v155
    %v992 = vunpack.c.h.b16 %v155
    %v993 = vunpack.c.l.b16 %v156
    %v994 = vunpack.c.h.b16 %v156
    %v995 = vunpack.c.l.b16 %v157
    %v996 = vunpack.c.h.b16 %v157
    %v997 = vunpack.c.l.b16 %v158
    %v998 = vunpack.c.h.b16 %v158
    %v999 = vunpack.c.l.b16 %v159
    %v1000 = vunpack.c.h.b16 %v159
    %v1001 = vunpack.c.l.b16 %v160
    %v1002 = vunpack.c.h.b16 %v160
    %v1003 = vunpack.c.l.b16 %v161
    %v1004 = vunpack.c.h.b16 %v161
    %v1005 = vunpack.c.l.b16 %v162
    %v1006 = vunpack.c.h.b16 %v162
    %v1007 = vunpack.c.l.b16 %v163
    %v1008 = vunpack.c.h.b16 %v163
    %v1009 = vunpack.c.l.b16 %v164
    %v1010 = vunpack.c.h.b16 %v164
    %v1011 = vunpack.c.l.b16 %v165
    %v1012 = vunpack.c.h.b16 %v165
    %v1013 = vunpack.c.l.b16 %v166
    %v1014 = vunpack.c.h.b16 %v166
    %v1015 = vunpack.c.l.b16 %v167
    %v1016 = vunpack.c.h.b16 %v167
    %v1017 = vunpack.c.l.b16 %v168
    %v1018 = vunpack.c.h.b16 %v168
    %v1019 = vunpack.c.l.b16 %v169
    %v1020 = vunpack.c.h.b16 %v169
    %v1021 = vunpack.c.l.b16 %v170
    %v1022 = vunpack.c.h.b16 %v170
    %v1023 = vunpack.c.l.b16 %v171
    %v1024 = vunpack.c.h.b16 %v171
    %v1025 = vunpack.c.l.b16 %v172
    %v1026 = vunpack.c.h.b16 %v172
    %v1027 = vunpack.c.l.b16 %v173
    %v1028 = vunpack.c.h.b16 %v173
    %v1029 = vunpack.c.l.b16 %v174
    %v1030 = vunpack.c.h.b16 %v174
    %v1031 = vunpack.c.l.b16 %v175
    %v1032 = vunpack.c.h.b16 %v175
    %v1033 = vunpack.c.l.b16 %v176
    %v1034 = vunpack.c.h.b16 %v176
    %v1035 = vunpack.c.l.b16 %v177
    %v1036 = vunpack.c.h.b16 %v177
    %v1037 = vunpack.c.l.b16 %v178
    %v1038 = vunpack.c.h.b16 %v178
    %v1039 = vunpack.c.l.b16 %v179
    %v1040 = vunpack.c.h.b16 %v179
    %v1041 = vunpack.c.l.b16 %v180
    %v1042 = vunpack.c.h.b16 %v180
    %v1043 = vunpack.c.l.b16 %v181
    %v1044 = vunpack.c.h.b16 %v181
    %v1045 = vunpack.c.l.b16 %v182
    %v1046 = vunpack.c.h.b16 %v182
    %v1047 = vunpack.c.l.b16 %v183
    %v1048 = vunpack.c.h.b16 %v183
    %v1049 = vunpack.c.l.b16 %v184
    %v1050 = vunpack.c.h.b16 %v184
    %v1051 = vunpack.c.l.b16 %v185
    %v1052 = vunpack.c.h.b16 %v185
    %v1053 = vunpack.c.l.b16 %v186
    %v1054 = vunpack.c.h.b16 %v186
    %v1055 = vunpack.c.l.b16 %v187
    %v1056 = vunpack.c.h.b16 %v187
    %v1057 = vunpack.c.l.b16 %v188
    %v1058 = vunpack.c.h.b16 %v188
    %v1059 = vunpack.c.l.b16 %v189
    %v1060 = vunpack.c.h.b16 %v189
    %v1061 = vunpack.c.l.b16 %v190
    %v1062 = vunpack.c.h.b16 %v190
    %v1063 = vunpack.c.l.b16 %v191
    %v1064 = vunpack.c.h.b16 %v191
    %v1065 = vunpack.c.l.b16 %v192
    %v1066 = vunpack.c.h.b16 %v192
    %v1067 = vunpack.c.l.b16 %v193
    %v1068 = vunpack.c.h.b16 %v193
    %v1069 = vunpack.c.l.b16 %v194
    %v1070 = vunpack.c.h.b16 %v194
    %v1071 = vunpack.c.l.b16 %v195
    %v1072 = vunpack.c.h.b16 %v195
    %v1073 = vunpack.c.l.b16 %v196
    %v1074 = vunpack.c.h.b16 %v196
    %v1075 = vunpack.c.l.b16 %v197
    %v1076 = vunpack.c.h.b16 %v197
    %v1077 = vunpack.c.l.b16 %v198
    %v1078 = vunpack.c.h.b16 %v198
    %v1079 = vunpack.c.l.b16 %v199
    %v1080 = vunpack.c.h.b16 %v199
    %v1081 = vunpack.c.l.b16 %v200
    %v1082 = vunpack.c.h.b16 %v200
    %v1083 = vunpack.c.l.b16 %v201
    %v1084 = vunpack.c.h.b16 %v201
    %v1085 = vunpack.c.l.b16 %v202
    %v1086 = vunpack.c.h.b16 %v202
    %v1087 = vunpack.c.l.b16 %v203
    %v1088 = vunpack.c.h.b16 %v203
    %v1089 = vunpack.c.l.b16 %v204
    %v1090 = vunpack.c.h.b16 %v204
    %v1091 = vunpack.c.l.b16 %v205
    %v1092 = vunpack.c.h.b16 %v205
    %v1093 = vunpack.c.l.b16 %v206
    %v1094 = vunpack.c.h.b16 %v206
    %v1095 = vunpack.c.l.b16 %v207
    %v1096 = vunpack.c.h.b16 %v207
    %v1097 = vunpack.c.l.b16 %v208
    %v1098 = vunpack.c.h.b16 %v208
    %v1099 = vunpack.c.l.b16 %v209
    %v1100 = vunpack.c.h.b16 %v209
    %v1101 = vunpack.c.l.b16 %v210
    %v1102 = vunpack.c.h.b16 %v210
    %v1103 = vunpack.c.l.b16 %v211
    %v1104 = vunpack.c.h.b16 %v211
    %v1105 = vunpack.c.l.b16 %v212
    %v1106 = vunpack.c.h.b16 %v212
    %v1107 = vunpack.c.l.b16 %v213
    %v1108 = vunpack.c.h.b16 %v213
    %v1109 = vunpack.c.l.b16 %v214
    %v1110 = vunpack.c.h.b16 %v214
    %v1111 = vunpack.c.l.b16 %v215
    %v1112 = vunpack.c.h.b16 %v215
    %v1113 = vunpack.c.l.b16 %v216
    %v1114 = vunpack.c.h.b16 %v216
    %v1115 = vunpack.c.l.b16 %v217
    %v1116 = vunpack.c.h.b16 %v217
    %v1117 = vunpack.c.l.b16 %v218
    %v1118 = vunpack.c.h.b16 %v218
    %v1119 = vunpack.c.l.b16 %v219
    %v1120 = vunpack.c.h.b16 %v219
    %v1121 = vunpack.c.l.b16 %v220
    %v1122 = vunpack.c.h.b16 %v220
    %v1123 = vunpack.c.l.b16 %v221
    %v1124 = vunpack.c.h.b16 %v221
    %v1125 = vunpack.c.l.b16 %v222
    %v1126 = vunpack.c.h.b16 %v222
    %v1127 = vunpack.c.l.b16 %v223
    %v1128 = vunpack.c.h.b16 %v223
    %v1129 = vunpack.c.l.b16 %v224
    %v1130 = vunpack.c.h.b16 %v224
    %v1131 = vunpack.c.l.b16 %v225
    %v1132 = vunpack.c.h.b16 %v225
    %v1133 = vunpack.c.l.b16 %v226
    %v1134 = vunpack.c.h.b16 %v226
    %v1135 = vunpack.c.l.b16 %v227
    %v1136 = vunpack.c.h.b16 %v227
    %v1137 = vunpack.c.l.b16 %v228
    %v1138 = vunpack.c.h.b16 %v228
    %v1139 = vunpack.c.l.b16 %v229
    %v1140 = vunpack.c.h.b16 %v229
    %v1141 = vunpack.c.l.b16 %v230
    %v1142 = vunpack.c.h.b16 %v230
    %v1143 = vunpack.c.l.b16 %v231
    %v1144 = vunpack.c.h.b16 %v231
    %v1145 = vunpack.c.l.b16 %v232
    %v1146 = vunpack.c.h.b16 %v232
    %v1147 = vunpack.c.l.b16 %v233
    %v1148 = vunpack.c.h.b16 %v233
    %v1149 = vunpack.c.l.b16 %v234
    %v1150 = vunpack.c.h.b16 %v234
    %v1151 = vunpack.c.l.b16 %v235
    %v1152 = vunpack.c.h.b16 %v235
    %v1153 = vunpack.c.l.b16 %v236
    %v1154 = vunpack.c.h.b16 %v236
    %v1155 = vunpack.c.l.b16 %v237
    %v1156 = vunpack.c.h.b16 %v237
    %v1157 = vunpack.c.l.b16 %v238
    %v1158 = vunpack.c.h.b16 %v238
    %v1159 = vunpack.c.l.b16 %v239
    %v1160 = vunpack.c.h.b16 %v239
    %v1161 = vunpack.c.l.b16 %v240
    %v1162 = vunpack.c.h.b16 %v240
    %v1163 = vunpack.c.l.b16 %v241
    %v1164 = vunpack.c.h.b16 %v241
    %v1165 = vunpack.c.l.b16 %v242
    %v1166 = vunpack.c.h.b16 %v242
    %v1167 = vunpack.c.l.b16 %v243
    %v1168 = vunpack.c.h.b16 %v243
    %v1169 = vunpack.c.l.b16 %v244
    %v1170 = vunpack.c.h.b16 %v244
    %v1171 = vunpack.c.l.b16 %v245
    %v1172 = vunpack.c.h.b16 %v245
    %v1173 = vunpack.c.l.b16 %v246
    %v1174 = vunpack.c.h.b16 %v246
    %v1175 = vunpack.c.l.b16 %v247
    %v1176 = vunpack.c.h.b16 %v247
    %v1177 = vunpack.c.l.b16 %v248
    %v1178 = vunpack.c.h.b16 %v248
    %v1179 = vunpack.c.l.b16 %v249
    %v1180 = vunpack.c.h.b16 %v249
    %v1181 = vunpack.c.l.b16 %v250
    %v1182 = vunpack.c.h.b16 %v250
    %v1183 = vunpack.c.l.b16 %v251
    %v1184 = vunpack.c.h.b16 %v251
    %v1185 = vunpack.c.l.b16 %v252
    %v1186 = vunpack.c.h.b16 %v252
    %v1187 = vunpack.c.l.b16 %v253
    %v1188 = vunpack.c.h.b16 %v253
    %v1189 = vunpack.c.l.b16 %v254
    %v1190 = vunpack.c.h.b16 %v254
    %v1191 = vunpack.c.l.b16 %v255
    %v1192 = vunpack.c.h.b16 %v255
    %v1193 = vunpack.c.l.b16 %v256
    %v1194 = vunpack.c.h.b16 %v256
    %v1195 = vunpack.c.l.b16 %v257
    %v1196 = vunpack.c.h.b16 %v257
    %v1197 = vpack.c.b16 %v949, %v941
    %v1198 = vpack.c.b16 %v950, %v942
    %v1199 = vpack.c.b16 %v951, %v943
    %v1200 = vpack.c.b16 %v952, %v944
    %v1201 = vpack.c.b16 %v953, %v945
    %v1202 = vpack.c.b16 %v954, %v946
    %v1203 = vpack.c.b16 %v955, %v947
    %v1204 = vpack.c.b16 %v956, %v948
    %v1205 = vpack.c.b16 %v965, %v957
    %v1206 = vpack.c.b16 %v966, %v958
    %v1207 = vpack.c.b16 %v967, %v959
    %v1208 = vpack.c.b16 %v968, %v960
    %v1209 = vpack.c.b16 %v969, %v961
    %v1210 = vpack.c.b16 %v970, %v962
    %v1211 = vpack.c.b16 %v971, %v963
    %v1212 = vpack.c.b16 %v972, %v964
    %v1213 = vpack.c.b16 %v981, %v973
    %v1214 = vpack.c.b16 %v982, %v974
    %v1215 = vpack.c.b16 %v983, %v975
    %v1216 = vpack.c.b16 %v984, %v976
    %v1217 = vpack.c.b16 %v985, %v977
    %v1218 = vpack.c.b16 %v986, %v978
    %v1219 = vpack.c.b16 %v987, %v979
    %v1220 = vpack.c.b16 %v988, %v980
    %v1221 = vpack.c.b16 %v997, %v989
    %v1222 = vpack.c.b16 %v998, %v990
    %v1223 = vpack.c.b16 %v999, %v991
    %v1224 = vpack.c.b16 %v1000, %v992
    %v1225 = vpack.c.b16 %v1001, %v993
    %v1226 = vpack.c.b16 %v1002, %v994
    %v1227 = vpack.c.b16 %v1003, %v995
    %v1228 = vpack.c.b16 %v1004, %v996
    %v1229 = vpack.c.b16 %v1013, %v1005
    %v1230 = vpack.c.b16 %v1014, %v1006
    %v1231 = vpack.c.b16 %v1015, %v1007
    %v1232 = vpack.c.b16 %v1016, %v1008
    %v1233 = vpack.c.b16 %v1017, %v1009
    %v1234 = vpack.c.b16 %v1018, %v1010
    %v1235 = vpack.c.b16 %v1019, %v1011
    %v1236 = vpack.c.b16 %v1020, %v1012
    %v1237 = vpack.c.b16 %v1029, %v1021
    %v1238 = vpack.c.b16 %v1030, %v1022
    %v1239 = vpack.c.b16 %v1031, %v1023
    %v1240 = vpack.c.b16 %v1032, %v1024
    %v1241 = vpack.c.b16 %v1033, %v1025
    %v1242 = vpack.c.b16 %v1034, %v1026
    %v1243 = vpack.c.b16 %v1035, %v1027
    %v1244 = vpack.c.b16 %v1036, %v1028
    %v1245 = vpack.c.b16 %v1045, %v1037
    %v1246 = vpack.c.b16 %v1046, %v1038
    %v1247 = vpack.c.b16 %v1047, %v1039
    %v1248 = vpack.c.b16 %v1048, %v1040
    %v1249 = vpack.c.b16 %v1049, %v1041
    %v1250 = vpack.c.b16 %v1050, %v1042
    %v1251 = vpack.c.b16 %v1051, %v1043
    %v1252 = vpack.c.b16 %v1052, %v1044
    %v1253 = vpack.c.b16 %v1061, %v1053
    %v1254 = vpack.c.b16 %v1062, %v1054
    %v1255 = vpack.c.b16 %v1063, %v1055
    %v1256 = vpack.c.b16 %v1064, %v1056
    %v1257 = vpack.c.b16 %v1065, %v1057
    %v1258 = vpack.c.b16 %v1066, %v1058
    %v1259 = vpack.c.b16 %v1067, %v1059
    %v1260 = vpack.c.b16 %v1068, %v1060
    %v1261 = vpack.c.b16 %v1077, %v1069
    %v1262 = vpack.c.b16 %v1078, %v1070
    %v1263 = vpack.c.b16 %v1079, %v1071
    %v1264 = vpack.c.b16 %v1080, %v1072
    %v1265 = vpack.c.b16 %v1081, %v1073
    %v1266 = vpack.c.b16 %v1082, %v1074
    %v1267 = vpack.c.b16 %v1083, %v1075
    %v1268 = vpack.c.b16 %v1084, %v1076
    %v1269 = vpack.c.b16 %v1093, %v1085
    %v1270 = vpack.c.b16 %v1094, %v1086
    %v1271 = vpack.c.b16 %v1095, %v1087
    %v1272 = vpack.c.b16 %v1096, %v1088
    %v1273 = vpack.c.b16 %v1097, %v1089
    %v1274 = vpack.c.b16 %v1098, %v1090
    %v1275 = vpack.c.b16 %v1099, %v1091
    %v1276 = vpack.c.b16 %v1100, %v1092
    %v1277 = vpack.c.b16 %v1109, %v1101
    %v1278 = vpack.c.b16 %v1110, %v1102
    %v1279 = vpack.c.b16 %v1111, %v1103
    %v1280 = vpack.c.b16 %v1112, %v1104
    %v1281 = vpack.c.b16 %v1113, %v1105
    %v1282 = vpack.c.b16 %v1114, %v1106
    %v1283 = vpack.c.b16 %v1115, %v1107
    %v1284 = vpack.c.b16 %v1116, %v1108
    %v1285 = vpack.c.b16 %v1125, %v1117
    %v1286 = vpack.c.b16 %v1126, %v1118
    %v1287 = vpack.c.b16 %v1127, %v1119
    %v1288 = vpack.c.b16 %v1128, %v1120
    %v1289 = vpack.c.b16 %v1129, %v1121
    %v1290 = vpack.c.b16 %v1130, %v1122
    %v1291 = vpack.c.b16 %v1131, %v1123
    %v1292 = vpack.c.b16 %v1132, %v1124
    %v1293 = vpack.c.b16 %v1141, %v1133
    %v1294 = vpack.c.b16 %v1142, %v1134
    %v1295 = vpack.c.b16 %v1143, %v1135
    %v1296 = vpack.c.b16 %v1144, %v1136
    %v1297 = vpack.c.b16 %v1145, %v1137
    %v1298 = vpack.c.b16 %v1146, %v1138
    %v1299 = vpack.c.b16 %v1147, %v1139
    %v1300 = vpack.c.b16 %v1148, %v1140
    %v1301 = vpack.c.b16 %v1157, %v1149
    %v1302 = vpack.c.b16 %v1158, %v1150
    %v1303 = vpack.c.b16 %v1159, %v1151
    %v1304 = vpack.c.b16 %v1160, %v1152
    %v1305 = vpack.c.b16 %v1161, %v1153
    %v1306 = vpack.c.b16 %v1162, %v1154
    %v1307 = vpack.c.b16 %v1163, %v1155
    %v1308 = vpack.c.b16 %v1164, %v1156
    %v1309 = vpack.c.b16 %v1173, %v1165
    %v1310 = vpack.c.b16 %v1174, %v1166
    %v1311 = vpack.c.b16 %v1175, %v1167
    %v1312 = vpack.c.b16 %v1176, %v1168
    %v1313 = vpack.c.b16 %v1177, %v1169
    %v1314 = vpack.c.b16 %v1178, %v1170
    %v1315 = vpack.c.b16 %v1179, %v1171
    %v1316 = vpack.c.b16 %v1180, %v1172
    %v1317 = vpack.c.b16 %v1189, %v1181
    %v1318 = vpack.c.b16 %v1190, %v1182
    %v1319 = vpack.c.b16 %v1191, %v1183
    %v1320 = vpack.c.b16 %v1192, %v1184
    %v1321 = vpack.c.b16 %v1193, %v1185
    %v1322 = vpack.c.b16 %v1194, %v1186
    %v1323 = vpack.c.b16 %v1195, %v1187
    %v1324 = vpack.c.b16 %v1196, %v1188
    %1453 = vmatprep.subr.bf16.mxu0 %v1198
    %1454 = vmatpush1.bf16.msra.mxu0 %v1197
    %1455 = vmatprep.subr.bf16.mxu0 %v1206
    %1456 = vmatpush1.bf16.msra.mxu0 %v1205
    %1457 = vmatprep.subr.bf16.mxu0 %v1214
    %1458 = vmatpush1.bf16.msra.mxu0 %v1213
    %1459 = vmatprep.subr.bf16.mxu0 %v1222
    %1460 = vmatpush1.bf16.msra.mxu0 %v1221
    %1461 = vmatprep.subr.bf16.mxu0 %v1230
    %1462 = vmatpush1.bf16.msra.mxu0 %v1229
    %1463 = vmatprep.subr.bf16.mxu0 %v1238
    %1464 = vmatpush1.bf16.msra.mxu0 %v1237
    %1465 = vmatprep.subr.bf16.mxu0 %v1246
    %1466 = vmatpush1.bf16.msra.mxu0 %v1245
    %1467 = vmatprep.subr.bf16.mxu0 %v1254
    %1468 = vmatpush1.bf16.msra.mxu0 %v1253
    %1469 = vmatprep.subr.bf16.mxu0 %v1262
    %1470 = vmatpush1.bf16.msra.mxu0 %v1261
    %1471 = vmatprep.subr.bf16.mxu0 %v1270
    %1472 = vmatpush1.bf16.msra.mxu0 %v1269
    %1473 = vmatprep.subr.bf16.mxu0 %v1278
    %1474 = vmatpush1.bf16.msra.mxu0 %v1277
    %1475 = vmatprep.subr.bf16.mxu0 %v1286
    %1476 = vmatpush1.bf16.msra.mxu0 %v1285
    %1477 = vmatprep.subr.bf16.mxu0 %v1294
    %1478 = vmatpush1.bf16.msra.mxu0 %v1293
    %1479 = vmatprep.subr.bf16.mxu0 %v1302
    %1480 = vmatpush1.bf16.msra.mxu0 %v1301
    %1481 = vmatprep.subr.bf16.mxu0 %v1310
    %1482 = vmatpush1.bf16.msra.mxu0 %v1309
    %1483 = vmatprep.subr.bf16.mxu0 %v1318
    %1484 = vmatpush1.bf16.msra.mxu0 %v1317
    %1485 = vmatprep.mubr.bf16.mxu0 %v810
    %1486 = vmatmul.mubr.bf16.gmra.mrb[0].mxu0 %v809
    %v1487 = vpop.f32.mrb[0].mxu0
    %v1488 = vadd.f32 %v677, %v1487
    %v1489 = vpop.f32.mrb[0].mxu0
    %v1490 = vadd.f32 %v679, %v1489
    %v1491 = vpop.f32.mrb[0].mxu0
    %v1492 = vpop.f32.mrb[0].mxu0
    %1493 = vdwg.mxu0
    %1494 = vmatprep.subr.bf16.mxu0 %v1200
    %1495 = vmatpush1.bf16.msra.mxu0 %v1199
    %1496 = vmatprep.subr.bf16.mxu0 %v1208
    %1497 = vmatpush1.bf16.msra.mxu0 %v1207
    %1498 = vmatprep.subr.bf16.mxu0 %v1216
    %1499 = vmatpush1.bf16.msra.mxu0 %v1215
    %1500 = vmatprep.subr.bf16.mxu0 %v1224
    %1501 = vmatpush1.bf16.msra.mxu0 %v1223
    %1502 = vmatprep.subr.bf16.mxu0 %v1232
    %1503 = vmatpush1.bf16.msra.mxu0 %v1231
    %1504 = vmatprep.subr.bf16.mxu0 %v1240
    %1505 = vmatpush1.bf16.msra.mxu0 %v1239
    %1506 = vmatprep.subr.bf16.mxu0 %v1248
    %1507 = vmatpush1.bf16.msra.mxu0 %v1247
    %1508 = vmatprep.subr.bf16.mxu0 %v1256
    %1509 = vmatpush1.bf16.msra.mxu0 %v1255
    %1510 = vmatprep.subr.bf16.mxu0 %v1264
    %1511 = vmatpush1.bf16.msra.mxu0 %v1263
    %1512 = vmatprep.subr.bf16.mxu0 %v1272
    %1513 = vmatpush1.bf16.msra.mxu0 %v1271
    %1514 = vmatprep.subr.bf16.mxu0 %v1280
    %1515 = vmatpush1.bf16.msra.mxu0 %v1279
    %1516 = vmatprep.subr.bf16.mxu0 %v1288
    %1517 = vmatpush1.bf16.msra.mxu0 %v1287
    %1518 = vmatprep.subr.bf16.mxu0 %v1296
    %1519 = vmatpush1.bf16.msra.mxu0 %v1295
    %1520 = vmatprep.subr.bf16.mxu0 %v1304
    %1521 = vmatpush1.bf16.msra.mxu0 %v1303
    %1522 = vmatprep.subr.bf16.mxu0 %v1312
    %1523 = vmatpush1.bf16.msra.mxu0 %v1311
    %1524 = vmatprep.subr.bf16.mxu0 %v1320
    %1525 = vmatpush1.bf16.msra.mxu0 %v1319
    %1526 = vmatprep.mubr.bf16.mxu0 %v810
    %1527 = vmatmul.mubr.bf16.gmra.mrb[0].mxu0 %v809
    %v1528 = vpop.f32.mrb[0].mxu0
    %v1529 = vadd.f32 %v718, %v1528
    %v1530 = vpop.f32.mrb[0].mxu0
    %v1531 = vadd.f32 %v720, %v1530
    %v1532 = vpop.f32.mrb[0].mxu0
    %v1533 = vpop.f32.mrb[0].mxu0
    %1534 = vdwg.mxu0
    %1535 = vmatprep.subr.bf16.mxu0 %v1202
    %1536 = vmatpush1.bf16.msra.mxu0 %v1201
    %1537 = vmatprep.subr.bf16.mxu0 %v1210
    %1538 = vmatpush1.bf16.msra.mxu0 %v1209
    %1539 = vmatprep.subr.bf16.mxu0 %v1218
    %1540 = vmatpush1.bf16.msra.mxu0 %v1217
    %1541 = vmatprep.subr.bf16.mxu0 %v1226
    %1542 = vmatpush1.bf16.msra.mxu0 %v1225
    %1543 = vmatprep.subr.bf16.mxu0 %v1234
    %1544 = vmatpush1.bf16.msra.mxu0 %v1233
    %1545 = vmatprep.subr.bf16.mxu0 %v1242
    %1546 = vmatpush1.bf16.msra.mxu0 %v1241
    %1547 = vmatprep.subr.bf16.mxu0 %v1250
    %1548 = vmatpush1.bf16.msra.mxu0 %v1249
    %1549 = vmatprep.subr.bf16.mxu0 %v1258
    %1550 = vmatpush1.bf16.msra.mxu0 %v1257
    %1551 = vmatprep.subr.bf16.mxu0 %v1266
    %1552 = vmatpush1.bf16.msra.mxu0 %v1265
    %1553 = vmatprep.subr.bf16.mxu0 %v1274
    %1554 = vmatpush1.bf16.msra.mxu0 %v1273
    %1555 = vmatprep.subr.bf16.mxu0 %v1282
    %1556 = vmatpush1.bf16.msra.mxu0 %v1281
    %1557 = vmatprep.subr.bf16.mxu0 %v1290
    %1558 = vmatpush1.bf16.msra.mxu0 %v1289
    %1559 = vmatprep.subr.bf16.mxu0 %v1298
    %1560 = vmatpush1.bf16.msra.mxu0 %v1297
    %1561 = vmatprep.subr.bf16.mxu0 %v1306
    %1562 = vmatpush1.bf16.msra.mxu0 %v1305
    %1563 = vmatprep.subr.bf16.mxu0 %v1314
    %1564 = vmatpush1.bf16.msra.mxu0 %v1313
    %1565 = vmatprep.subr.bf16.mxu0 %v1322
    %1566 = vmatpush1.bf16.msra.mxu0 %v1321
    %1567 = vmatprep.mubr.bf16.mxu0 %v810
    %1568 = vmatmul.mubr.bf16.gmra.mrb[0].mxu0 %v809
    %v1569 = vpop.f32.mrb[0].mxu0
    %v1570 = vadd.f32 %v759, %v1569
    %v1571 = vpop.f32.mrb[0].mxu0
    %v1572 = vadd.f32 %v761, %v1571
    %v1573 = vpop.f32.mrb[0].mxu0
    %v1574 = vpop.f32.mrb[0].mxu0
    %1575 = vdwg.mxu0
    %1576 = vmatprep.subr.bf16.mxu0 %v1204
    %1577 = vmatpush1.bf16.msra.mxu0 %v1203
    %1578 = vmatprep.subr.bf16.mxu0 %v1212
    %1579 = vmatpush1.bf16.msra.mxu0 %v1211
    %1580 = vmatprep.subr.bf16.mxu0 %v1220
    %1581 = vmatpush1.bf16.msra.mxu0 %v1219
    %1582 = vmatprep.subr.bf16.mxu0 %v1228
    %1583 = vmatpush1.bf16.msra.mxu0 %v1227
    %1584 = vmatprep.subr.bf16.mxu0 %v1236
    %1585 = vmatpush1.bf16.msra.mxu0 %v1235
    %1586 = vmatprep.subr.bf16.mxu0 %v1244
    %1587 = vmatpush1.bf16.msra.mxu0 %v1243
    %1588 = vmatprep.subr.bf16.mxu0 %v1252
    %1589 = vmatpush1.bf16.msra.mxu0 %v1251
    %1590 = vmatprep.subr.bf16.mxu0 %v1260
    %1591 = vmatpush1.bf16.msra.mxu0 %v1259
    %1592 = vmatprep.subr.bf16.mxu0 %v1268
    %1593 = vmatpush1.bf16.msra.mxu0 %v1267
    %1594 = vmatprep.subr.bf16.mxu0 %v1276
    %1595 = vmatpush1.bf16.msra.mxu0 %v1275
    %1596 = vmatprep.subr.bf16.mxu0 %v1284
    %1597 = vmatpush1.bf16.msra.mxu0 %v1283
    %1598 = vmatprep.subr.bf16.mxu0 %v1292
    %1599 = vmatpush1.bf16.msra.mxu0 %v1291
    %1600 = vmatprep.subr.bf16.mxu0 %v1300
    %1601 = vmatpush1.bf16.msra.mxu0 %v1299
    %1602 = vmatprep.subr.bf16.mxu0 %v1308
    %1603 = vmatpush1.bf16.msra.mxu0 %v1307
    %1604 = vmatprep.subr.bf16.mxu0 %v1316
    %1605 = vmatpush1.bf16.msra.mxu0 %v1315
    %1606 = vmatprep.subr.bf16.mxu0 %v1324
    %1607 = vmatpush1.bf16.msra.mxu0 %v1323
    %1608 = vmatprep.mubr.bf16.mxu0 %v810
    %1609 = vmatmul.mubr.bf16.gmra.mrb[0].mxu0 %v809
    %v1610 = vpop.f32.mrb[0].mxu0
    %v1611 = vadd.f32 %v800, %v1610
    %v1612 = vpop.f32.mrb[0].mxu0
    %v1613 = vadd.f32 %v802, %v1612
    %v1614 = vpop.f32.mrb[0].mxu0
    %v1615 = vpop.f32.mrb[0].mxu0
    %1616 = vdwg.mxu0
    %v1617 = vld [vmem:[%s4] sm:$0xff]
    %v1619 = vlaneseq
    %v1620 = vshrl.u32 %v1619, 7
    %v1621 = vsub.s32 0, %v1620
    %v1622 = vrot.slane %v1617, %v1621
    %v1623 = vlaneseq
    %v1624 = vshrl.u32 %v1623, 7
    %v1625 = vsub.s32 1, %v1624
    %v1626 = vrot.slane %v1617, %v1625
    %v1627 = vlaneseq
    %v1628 = vshrl.u32 %v1627, 7
    %v1629 = vsub.s32 2, %v1628
    %v1630 = vrot.slane %v1617, %v1629
    %v1631 = vlaneseq
    %v1632 = vshrl.u32 %v1631, 7
    %v1633 = vsub.s32 3, %v1632
    %v1634 = vrot.slane %v1617, %v1633
    %v1635 = vlaneseq
    %v1636 = vshrl.u32 %v1635, 7
    %v1637 = vsub.s32 4, %v1636
    %v1638 = vrot.slane %v1617, %v1637
    %v1639 = vlaneseq
    %v1640 = vshrl.u32 %v1639, 7
    %v1641 = vsub.s32 5, %v1640
    %v1642 = vrot.slane %v1617, %v1641
    %v1643 = vlaneseq
    %v1644 = vshrl.u32 %v1643, 7
    %v1645 = vsub.s32 6, %v1644
    %v1646 = vrot.slane %v1617, %v1645
    %v1647 = vlaneseq
    %v1648 = vshrl.u32 %v1647, 7
    %v1649 = vsub.s32 7, %v1648
    %v1650 = vrot.slane %v1617, %v1649
    %v1659 = vadd.f32 %v1488, %v1622
    %v1660 = vadd.f32 %v1490, %v1626
    %v1661 = vadd.f32 %v1529, %v1630
    %v1662 = vadd.f32 %v1531, %v1634
    %v1663 = vadd.f32 %v1570, %v1638
    %v1664 = vadd.f32 %v1572, %v1642
    %v1665 = vadd.f32 %v1611, %v1646
    %v1666 = vadd.f32 %v1613, %v1650
    %v1667 = vmax.f32 %v1659, %v1661
    %v1668 = vmax.f32 %v1660, %v1662
    %v1669 = vmax.f32 %v1663, %v1665
    %v1670 = vmax.f32 %v1664, %v1666
    %v1671 = vmax.f32 %v1667, %v1669
    %v1672 = vmax.f32 %v1668, %v1670
    %vm1673 = vcmp.gt.f32.partialorder %v1671, 0.0
    %vm1674 = vcmp.gt.f32.partialorder %v1672, 0.0
    %v1675 = vmin.f32 %v1671, 0.0
    %v1676 = vmin.f32 %v1672, 0.0
    %v1677 = vmul.f32 %v1675, 1.442695
    %v1678 = vpow.pop %v1677
    %v1679 = vmul.f32 %v1676, 1.442695
    %v1680 = vpow.pop %v1679
    %v1681 = vsub.f32 %v1678, 1.0
    %v1682 = vsub.f32 %v1680, 1.0
    %v1683 = vsel %vm1673, %v1671, %v1681
    %v1684 = vsel %vm1674, %v1672, %v1682
    %v1685 = vpack.c.bf16 %v1683, %v1683
    %v1686 = vpack.c.bf16 %v1684, %v1684
    %v1687 = vld [vmem:[%s5] sm:$0xf]
    %v1688 = vld [vmem:[%s5 + $0x4] sm:$0xf]
    %v1689 = vld [vmem:[%s5 + $0x8] sm:$0xf]
    %v1690 = vld [vmem:[%s5 + $0xc] sm:$0xf]
    %v1691 = vld [vmem:[%s5 + $0x10] sm:$0xf]
    %v1692 = vld [vmem:[%s5 + $0x14] sm:$0xf]
    %v1693 = vld [vmem:[%s5 + $0x18] sm:$0xf]
    %v1694 = vld [vmem:[%s5 + $0x1c] sm:$0xf]
    %v1695 = vld [vmem:[%s5 + $0x20] sm:$0xf]
    %v1696 = vld [vmem:[%s5 + $0x24] sm:$0xf]
    %v1697 = vld [vmem:[%s5 + $0x28] sm:$0xf]
    %v1698 = vld [vmem:[%s5 + $0x2c] sm:$0xf]
    %v1699 = vld [vmem:[%s5 + $0x30] sm:$0xf]
    %v1700 = vld [vmem:[%s5 + $0x34] sm:$0xf]
    %v1701 = vld [vmem:[%s5 + $0x38] sm:$0xf]
    %v1702 = vld [vmem:[%s5 + $0x3c] sm:$0xf]
    %v1703 = vld [vmem:[%s5 + $0x40] sm:$0xf]
    %v1704 = vld [vmem:[%s5 + $0x44] sm:$0xf]
    %v1705 = vld [vmem:[%s5 + $0x48] sm:$0xf]
    %v1706 = vld [vmem:[%s5 + $0x4c] sm:$0xf]
    %v1707 = vld [vmem:[%s5 + $0x50] sm:$0xf]
    %v1708 = vld [vmem:[%s5 + $0x54] sm:$0xf]
    %v1709 = vld [vmem:[%s5 + $0x58] sm:$0xf]
    %v1710 = vld [vmem:[%s5 + $0x5c] sm:$0xf]
    %v1711 = vld [vmem:[%s5 + $0x60] sm:$0xf]
    %v1712 = vld [vmem:[%s5 + $0x64] sm:$0xf]
    %v1713 = vld [vmem:[%s5 + $0x68] sm:$0xf]
    %v1714 = vld [vmem:[%s5 + $0x6c] sm:$0xf]
    %v1715 = vld [vmem:[%s5 + $0x70] sm:$0xf]
    %v1716 = vld [vmem:[%s5 + $0x74] sm:$0xf]
    %v1717 = vld [vmem:[%s5 + $0x78] sm:$0xf]
    %v1718 = vld [vmem:[%s5 + $0x7c] sm:$0xf]
    %v1719 = vld [vmem:[%s6] sm:$0x1]
    %v1721 = vlaneseq
    %v1722 = vshrl.u32 %v1721, 7
    %v1723 = vsub.s32 0, %v1722
    %v1724 = vrot.slane %v1719, %v1723
    %v1758 = vunpack.c.l.b16 %v1687
    %v1759 = vunpack.c.l.b16 %v1688
    %v1760 = vunpack.c.l.b16 %v1689
    %v1761 = vunpack.c.l.b16 %v1690
    %v1762 = vunpack.c.l.b16 %v1691
    %v1763 = vunpack.c.l.b16 %v1692
    %v1764 = vunpack.c.l.b16 %v1693
    %v1765 = vunpack.c.l.b16 %v1694
    %v1766 = vunpack.c.l.b16 %v1695
    %v1767 = vunpack.c.l.b16 %v1696
    %v1768 = vunpack.c.l.b16 %v1697
    %v1769 = vunpack.c.l.b16 %v1698
    %v1770 = vunpack.c.l.b16 %v1699
    %v1771 = vunpack.c.l.b16 %v1700
    %v1772 = vunpack.c.l.b16 %v1701
    %v1773 = vunpack.c.l.b16 %v1702
    %v1774 = vunpack.c.l.b16 %v1703
    %v1775 = vunpack.c.l.b16 %v1704
    %v1776 = vunpack.c.l.b16 %v1705
    %v1777 = vunpack.c.l.b16 %v1706
    %v1778 = vunpack.c.l.b16 %v1707
    %v1779 = vunpack.c.l.b16 %v1708
    %v1780 = vunpack.c.l.b16 %v1709
    %v1781 = vunpack.c.l.b16 %v1710
    %v1782 = vunpack.c.l.b16 %v1711
    %v1783 = vunpack.c.l.b16 %v1712
    %v1784 = vunpack.c.l.b16 %v1713
    %v1785 = vunpack.c.l.b16 %v1714
    %v1786 = vunpack.c.l.b16 %v1715
    %v1787 = vunpack.c.l.b16 %v1716
    %v1788 = vunpack.c.l.b16 %v1717
    %v1789 = vunpack.c.l.b16 %v1718
    %v1790 = vpack.c.b16 %v1759, %v1758
    %v1791 = vpack.c.b16 %v1761, %v1760
    %v1792 = vpack.c.b16 %v1763, %v1762
    %v1793 = vpack.c.b16 %v1765, %v1764
    %v1794 = vpack.c.b16 %v1767, %v1766
    %v1795 = vpack.c.b16 %v1769, %v1768
    %v1796 = vpack.c.b16 %v1771, %v1770
    %v1797 = vpack.c.b16 %v1773, %v1772
    %v1798 = vpack.c.b16 %v1775, %v1774
    %v1799 = vpack.c.b16 %v1777, %v1776
    %v1800 = vpack.c.b16 %v1779, %v1778
    %v1801 = vpack.c.b16 %v1781, %v1780
    %v1802 = vpack.c.b16 %v1783, %v1782
    %v1803 = vpack.c.b16 %v1785, %v1784
    %v1804 = vpack.c.b16 %v1787, %v1786
    %v1805 = vpack.c.b16 %v1789, %v1788
    %1822 = vmatprep.subr.bf16.mxu0 0
    %1823 = vmatpush1.bf16.msra.mxu0 %v1790
    %1824 = vmatprep.subr.bf16.mxu0 0
    %1825 = vmatpush1.bf16.msra.mxu0 %v1791
    %1826 = vmatprep.subr.bf16.mxu0 0
    %1827 = vmatpush1.bf16.msra.mxu0 %v1792
    %1828 = vmatprep.subr.bf16.mxu0 0
    %1829 = vmatpush1.bf16.msra.mxu0 %v1793
    %1830 = vmatprep.subr.bf16.mxu0 0
    %1831 = vmatpush1.bf16.msra.mxu0 %v1794
    %1832 = vmatprep.subr.bf16.mxu0 0
    %1833 = vmatpush1.bf16.msra.mxu0 %v1795
    %1834 = vmatprep.subr.bf16.mxu0 0
    %1835 = vmatpush1.bf16.msra.mxu0 %v1796
    %1836 = vmatprep.subr.bf16.mxu0 0
    %1837 = vmatpush1.bf16.msra.mxu0 %v1797
    %1838 = vmatprep.subr.bf16.mxu0 0
    %1839 = vmatpush1.bf16.msra.mxu0 %v1798
    %1840 = vmatprep.subr.bf16.mxu0 0
    %1841 = vmatpush1.bf16.msra.mxu0 %v1799
    %1842 = vmatprep.subr.bf16.mxu0 0
    %1843 = vmatpush1.bf16.msra.mxu0 %v1800
    %1844 = vmatprep.subr.bf16.mxu0 0
    %1845 = vmatpush1.bf16.msra.mxu0 %v1801
    %1846 = vmatprep.subr.bf16.mxu0 0
    %1847 = vmatpush1.bf16.msra.mxu0 %v1802
    %1848 = vmatprep.subr.bf16.mxu0 0
    %1849 = vmatpush1.bf16.msra.mxu0 %v1803
    %1850 = vmatprep.subr.bf16.mxu0 0
    %1851 = vmatpush1.bf16.msra.mxu0 %v1804
    %1852 = vmatprep.subr.bf16.mxu0 0
    %1853 = vmatpush1.bf16.msra.mxu0 %v1805
    %1854 = vmatprep.mubr.bf16.mxu0 %v1686
    %1855 = vmatmul.mubr.bf16.gmra.mrb[0].mxu0 %v1685
    %v1856 = vpop.f32.mrb[0].mxu0
    %v1857 = vadd.f32 %v1724, %v1856
    %v1858 = vpop.f32.mrb[0].mxu0
    %v1859 = vpop.f32.mrb[0].mxu0
    %v1860 = vpop.f32.mrb[0].mxu0
    %1861 = vdwg.mxu0
    %vm1862 = vcmp.gt.f32.partialorder %v1857, 0.0
    %v1863 = vmin.f32 %v1857, 0.0
    %v1864 = vmul.f32 %v1863, 1.442695
    %v1865 = vpow.pop %v1864
    %v1866 = vsub.f32 %v1865, 1.0
    %v1867 = vsel %vm1862, %v1857, %v1866
    %v1868 = vpack.c.bf16 %v1867, %v1867
    %v1869 = vld [vmem:[%s7] sm:$0xf]
    %v1870 = vld [vmem:[%s7 + $0x4] sm:$0xf]
    %v1871 = vld [vmem:[%s7 + $0x8] sm:$0xf]
    %v1872 = vld [vmem:[%s7 + $0xc] sm:$0xf]
    %v1873 = vld [vmem:[%s7 + $0x10] sm:$0xf]
    %v1874 = vld [vmem:[%s7 + $0x14] sm:$0xf]
    %v1875 = vld [vmem:[%s7 + $0x18] sm:$0xf]
    %v1876 = vld [vmem:[%s7 + $0x1c] sm:$0xf]
    %v1877 = vld [vmem:[%s7 + $0x20] sm:$0xf]
    %v1878 = vld [vmem:[%s7 + $0x24] sm:$0xf]
    %v1879 = vld [vmem:[%s7 + $0x28] sm:$0xf]
    %v1880 = vld [vmem:[%s7 + $0x2c] sm:$0xf]
    %v1881 = vld [vmem:[%s7 + $0x30] sm:$0xf]
    %v1882 = vld [vmem:[%s7 + $0x34] sm:$0xf]
    %v1883 = vld [vmem:[%s7 + $0x38] sm:$0xf]
    %v1884 = vld [vmem:[%s7 + $0x3c] sm:$0xf]
    %v1885 = vld [vmem:[%s8] sm:$0x1]
    %v1887 = vlaneseq
    %v1888 = vshrl.u32 %v1887, 7
    %v1889 = vsub.s32 0, %v1888
    %v1890 = vrot.slane %v1885, %v1889
    %v1908 = vunpack.c.l.b16 %v1869
    %v1909 = vunpack.c.l.b16 %v1870
    %v1910 = vunpack.c.l.b16 %v1871
    %v1911 = vunpack.c.l.b16 %v1872
    %v1912 = vunpack.c.l.b16 %v1873
    %v1913 = vunpack.c.l.b16 %v1874
    %v1914 = vunpack.c.l.b16 %v1875
    %v1915 = vunpack.c.l.b16 %v1876
    %v1916 = vunpack.c.l.b16 %v1877
    %v1917 = vunpack.c.l.b16 %v1878
    %v1918 = vunpack.c.l.b16 %v1879
    %v1919 = vunpack.c.l.b16 %v1880
    %v1920 = vunpack.c.l.b16 %v1881
    %v1921 = vunpack.c.l.b16 %v1882
    %v1922 = vunpack.c.l.b16 %v1883
    %v1923 = vunpack.c.l.b16 %v1884
    %v1924 = vpack.c.b16 %v1909, %v1908
    %v1925 = vpack.c.b16 %v1911, %v1910
    %v1926 = vpack.c.b16 %v1913, %v1912
    %v1927 = vpack.c.b16 %v1915, %v1914
    %v1928 = vpack.c.b16 %v1917, %v1916
    %v1929 = vpack.c.b16 %v1919, %v1918
    %v1930 = vpack.c.b16 %v1921, %v1920
    %v1931 = vpack.c.b16 %v1923, %v1922
    %1940 = vmatprep.subr.bf16.mxu0 0
    %1941 = vmatpush1.bf16.msra.mxu0 %v1924
    %1942 = vmatprep.subr.bf16.mxu0 0
    %1943 = vmatpush1.bf16.msra.mxu0 %v1925
    %1944 = vmatprep.subr.bf16.mxu0 0
    %1945 = vmatpush1.bf16.msra.mxu0 %v1926
    %1946 = vmatprep.subr.bf16.mxu0 0
    %1947 = vmatpush1.bf16.msra.mxu0 %v1927
    %1948 = vmatprep.subr.bf16.mxu0 0
    %1949 = vmatpush1.bf16.msra.mxu0 %v1928
    %1950 = vmatprep.subr.bf16.mxu0 0
    %1951 = vmatpush1.bf16.msra.mxu0 %v1929
    %1952 = vmatprep.subr.bf16.mxu0 0
    %1953 = vmatpush1.bf16.msra.mxu0 %v1930
    %1954 = vmatprep.subr.bf16.mxu0 0
    %1955 = vmatpush1.bf16.msra.mxu0 %v1931
    %1956 = vmatprep.subr.bf16.mxu0 0
    %1957 = vmatpush1.bf16.msra.mxu0 0
    %1958 = vmatprep.subr.bf16.mxu0 0
    %1959 = vmatpush1.bf16.msra.mxu0 0
    %1960 = vmatprep.subr.bf16.mxu0 0
    %1961 = vmatpush1.bf16.msra.mxu0 0
    %1962 = vmatprep.subr.bf16.mxu0 0
    %1963 = vmatpush1.bf16.msra.mxu0 0
    %1964 = vmatprep.subr.bf16.mxu0 0
    %1965 = vmatpush1.bf16.msra.mxu0 0
    %1966 = vmatprep.subr.bf16.mxu0 0
    %1967 = vmatpush1.bf16.msra.mxu0 0
    %1968 = vmatprep.subr.bf16.mxu0 0
    %1969 = vmatpush1.bf16.msra.mxu0 0
    %1970 = vmatprep.subr.bf16.mxu0 0
    %1971 = vmatpush1.bf16.msra.mxu0 0
    %1972 = vmatprep.mubr.bf16.mxu0 0
    %1973 = vmatmul.mubr.bf16.gmra.mrb[0].mxu0 %v1868
    %v1974 = vpop.f32.mrb[0].mxu0
    %v1975 = vadd.f32 %v1890, %v1974
    %v1976 = vpop.f32.mrb[0].mxu0
    %v1977 = vpop.f32.mrb[0].mxu0
    %v1978 = vpop.f32.mrb[0].mxu0
    %1979 = vdwg.mxu0
    %vm1980 = vcmp.gt.f32.partialorder %v1975, 0.0
    %v1981 = vmin.f32 %v1975, 0.0
    %v1982 = vmul.f32 %v1981, 1.442695
    %v1983 = vpow.pop %v1982
    %v1984 = vsub.f32 %v1983, 1.0
    %v1985 = vsel %vm1980, %v1975, %v1984
    %v1986 = vpack.c.bf16 %v1985, %v1985
    %v1987 = vld [vmem:[#allocation6] sm:$0xff]
    %v1988 = vld [vmem:[#allocation6 + $0x8] sm:$0xff]
    %v1989 = vld [vmem:[#allocation6 + $0x10] sm:$0xff]
    %v1990 = vld [vmem:[#allocation6 + $0x18] sm:$0xff]
    %v1991 = vld [vmem:[#allocation6 + $0x20] sm:$0xff]
    %v1992 = vld [vmem:[#allocation6 + $0x28] sm:$0xff]
    %v1993 = vld [vmem:[#allocation6 + $0x30] sm:$0xff]
    %v1994 = vld [vmem:[#allocation6 + $0x38] sm:$0xff]
    %v1995 = vld [vmem:[#allocation6 + $0x40] sm:$0xff]
    %v1996 = vld [vmem:[#allocation6 + $0x48] sm:$0xff]
    %v1997 = vld [vmem:[#allocation6 + $0x50] sm:$0xff]
    %v1998 = vld [vmem:[#allocation6 + $0x58] sm:$0xff]
    %v1999 = vld [vmem:[#allocation6 + $0x60] sm:$0xff]
    %v2000 = vld [vmem:[#allocation6 + $0x68] sm:$0xff]
    %v2001 = vld [vmem:[#allocation6 + $0x70] sm:$0xff]
    %v2002 = vld [vmem:[#allocation6 + $0x78] sm:$0xff]
    %v2003 = vld [vmem:[%s10] sm:$0x3]
    %v2005 = vlaneseq
    %v2006 = vshrl.u32 %v2005, 7
    %v2007 = vsub.s32 0, %v2006
    %v2008 = vrot.slane %v2003, %v2007
    %v2009 = vlaneseq
    %v2010 = vshrl.u32 %v2009, 7
    %v2011 = vsub.s32 1, %v2010
    %v2012 = vrot.slane %v2003, %v2011
    %v2031 = vunpack.c.l.b16 %v1987
    %v2032 = vunpack.c.h.b16 %v1987
    %v2033 = vunpack.c.l.b16 %v1988
    %v2034 = vunpack.c.h.b16 %v1988
    %v2035 = vunpack.c.l.b16 %v1989
    %v2036 = vunpack.c.h.b16 %v1989
    %v2037 = vunpack.c.l.b16 %v1990
    %v2038 = vunpack.c.h.b16 %v1990
    %v2039 = vunpack.c.l.b16 %v1991
    %v2040 = vunpack.c.h.b16 %v1991
    %v2041 = vunpack.c.l.b16 %v1992
    %v2042 = vunpack.c.h.b16 %v1992
    %v2043 = vunpack.c.l.b16 %v1993
    %v2044 = vunpack.c.h.b16 %v1993
    %v2045 = vunpack.c.l.b16 %v1994
    %v2046 = vunpack.c.h.b16 %v1994
    %v2047 = vunpack.c.l.b16 %v1995
    %v2048 = vunpack.c.h.b16 %v1995
    %v2049 = vunpack.c.l.b16 %v1996
    %v2050 = vunpack.c.h.b16 %v1996
    %v2051 = vunpack.c.l.b16 %v1997
    %v2052 = vunpack.c.h.b16 %v1997
    %v2053 = vunpack.c.l.b16 %v1998
    %v2054 = vunpack.c.h.b16 %v1998
    %v2055 = vunpack.c.l.b16 %v1999
    %v2056 = vunpack.c.h.b16 %v1999
    %v2057 = vunpack.c.l.b16 %v2000
    %v2058 = vunpack.c.h.b16 %v2000
    %v2059 = vunpack.c.l.b16 %v2001
    %v2060 = vunpack.c.h.b16 %v2001
    %v2061 = vunpack.c.l.b16 %v2002
    %v2062 = vunpack.c.h.b16 %v2002
    %v2063 = vpack.c.b16 %v2033, %v2031
    %v2064 = vpack.c.b16 %v2034, %v2032
    %v2065 = vpack.c.b16 %v2037, %v2035
    %v2066 = vpack.c.b16 %v2038, %v2036
    %v2067 = vpack.c.b16 %v2041, %v2039
    %v2068 = vpack.c.b16 %v2042, %v2040
    %v2069 = vpack.c.b16 %v2045, %v2043
    %v2070 = vpack.c.b16 %v2046, %v2044
    %v2071 = vpack.c.b16 %v2049, %v2047
    %v2072 = vpack.c.b16 %v2050, %v2048
    %v2073 = vpack.c.b16 %v2053, %v2051
    %v2074 = vpack.c.b16 %v2054, %v2052
    %v2075 = vpack.c.b16 %v2057, %v2055
    %v2076 = vpack.c.b16 %v2058, %v2056
    %v2077 = vpack.c.b16 %v2061, %v2059
    %v2078 = vpack.c.b16 %v2062, %v2060
    %2095 = vmatprep.subr.bf16.mxu0 %v2064
    %2096 = vmatpush1.bf16.msra.mxu0 %v2063
    %2097 = vmatprep.subr.bf16.mxu0 %v2066
    %2098 = vmatpush1.bf16.msra.mxu0 %v2065
    %2099 = vmatprep.subr.bf16.mxu0 %v2068
    %2100 = vmatpush1.bf16.msra.mxu0 %v2067
    %2101 = vmatprep.subr.bf16.mxu0 %v2070
    %2102 = vmatpush1.bf16.msra.mxu0 %v2069
    %2103 = vmatprep.subr.bf16.mxu0 %v2072
    %2104 = vmatpush1.bf16.msra.mxu0 %v2071
    %2105 = vmatprep.subr.bf16.mxu0 %v2074
    %2106 = vmatpush1.bf16.msra.mxu0 %v2073
    %2107 = vmatprep.subr.bf16.mxu0 %v2076
    %2108 = vmatpush1.bf16.msra.mxu0 %v2075
    %2109 = vmatprep.subr.bf16.mxu0 %v2078
    %2110 = vmatpush1.bf16.msra.mxu0 %v2077
    %2111 = vmatprep.subr.bf16.mxu0 0
    %2112 = vmatpush1.bf16.msra.mxu0 0
    %2113 = vmatprep.subr.bf16.mxu0 0
    %2114 = vmatpush1.bf16.msra.mxu0 0
    %2115 = vmatprep.subr.bf16.mxu0 0
    %2116 = vmatpush1.bf16.msra.mxu0 0
    %2117 = vmatprep.subr.bf16.mxu0 0
    %2118 = vmatpush1.bf16.msra.mxu0 0
    %2119 = vmatprep.subr.bf16.mxu0 0
    %2120 = vmatpush1.bf16.msra.mxu0 0
    %2121 = vmatprep.subr.bf16.mxu0 0
    %2122 = vmatpush1.bf16.msra.mxu0 0
    %2123 = vmatprep.subr.bf16.mxu0 0
    %2124 = vmatpush1.bf16.msra.mxu0 0
    %2125 = vmatprep.subr.bf16.mxu0 0
    %2126 = vmatpush1.bf16.msra.mxu0 0
    %2127 = vmatprep.mubr.bf16.mxu0 0
    %2128 = vmatmul.mubr.bf16.gmra.mrb[0].mxu0 %v1986
    %v2129 = vpop.f32.mrb[0].mxu0
    %v2130 = vadd.f32 %v2008, %v2129
    %v2131 = vpop.f32.mrb[0].mxu0
    %v2132 = vadd.f32 %v2012, %v2131
    %v2133 = vpop.f32.mrb[0].mxu0
    %v2134 = vpop.f32.mrb[0].mxu0
    %2135 = vdwg.mxu0
    %v2136 = vmax.f32 %v2130, 0.0
    %v2137 = vmax.f32 %v2132, 0.0
    %v2138 = vpack.c.bf16 %v2136, %v2136
    %v2139 = vpack.c.bf16 %v2137, %v2137
    %v2140 = vld [vmem:[#allocation7] sm:$0xf]
    %v2141 = vld [vmem:[#allocation7 + $0x4] sm:$0xf]
    %v2142 = vld [vmem:[#allocation7 + $0x8] sm:$0xf]
    %v2143 = vld [vmem:[#allocation7 + $0xc] sm:$0xf]
    %v2144 = vld [vmem:[#allocation7 + $0x10] sm:$0xf]
    %v2145 = vld [vmem:[#allocation7 + $0x14] sm:$0xf]
    %v2146 = vld [vmem:[#allocation7 + $0x18] sm:$0xf]
    %v2147 = vld [vmem:[#allocation7 + $0x1c] sm:$0xf]
    %v2148 = vld [vmem:[#allocation7 + $0x20] sm:$0xf]
    %v2149 = vld [vmem:[#allocation7 + $0x24] sm:$0xf]
    %v2150 = vld [vmem:[#allocation7 + $0x28] sm:$0xf]
    %v2151 = vld [vmem:[#allocation7 + $0x2c] sm:$0xf]
    %v2152 = vld [vmem:[#allocation7 + $0x30] sm:$0xf]
    %v2153 = vld [vmem:[#allocation7 + $0x34] sm:$0xf]
    %v2154 = vld [vmem:[#allocation7 + $0x38] sm:$0xf]
    %v2155 = vld [vmem:[#allocation7 + $0x3c] sm:$0xf]
    %v2156 = vld [vmem:[#allocation7 + $0x40] sm:$0xf]
    %v2157 = vld [vmem:[#allocation7 + $0x44] sm:$0xf]
    %v2158 = vld [vmem:[#allocation7 + $0x48] sm:$0xf]
    %v2159 = vld [vmem:[#allocation7 + $0x4c] sm:$0xf]
    %v2160 = vld [vmem:[#allocation7 + $0x50] sm:$0xf]
    %v2161 = vld [vmem:[#allocation7 + $0x54] sm:$0xf]
    %v2162 = vld [vmem:[#allocation7 + $0x58] sm:$0xf]
    %v2163 = vld [vmem:[#allocation7 + $0x5c] sm:$0xf]
    %v2164 = vld [vmem:[#allocation7 + $0x60] sm:$0xf]
    %v2165 = vld [vmem:[#allocation7 + $0x64] sm:$0xf]
    %v2166 = vld [vmem:[#allocation7 + $0x68] sm:$0xf]
    %v2167 = vld [vmem:[#allocation7 + $0x6c] sm:$0xf]
    %v2168 = vld [vmem:[#allocation7 + $0x70] sm:$0xf]
    %v2169 = vld [vmem:[#allocation7 + $0x74] sm:$0xf]
    %v2170 = vld [vmem:[#allocation7 + $0x78] sm:$0xf]
    %v2171 = vld [vmem:[#allocation7 + $0x7c] sm:$0xf]
    %v2172 = vld [vmem:[%s12] sm:$0x1]
    %v2174 = vlaneseq
    %v2175 = vshrl.u32 %v2174, 7
    %v2176 = vsub.s32 0, %v2175
    %v2177 = vrot.slane %v2172, %v2176
    %v2211 = vunpack.c.l.b16 %v2140
    %v2212 = vunpack.c.l.b16 %v2141
    %v2213 = vunpack.c.l.b16 %v2142
    %v2214 = vunpack.c.l.b16 %v2143
    %v2215 = vunpack.c.l.b16 %v2144
    %v2216 = vunpack.c.l.b16 %v2145
    %v2217 = vunpack.c.l.b16 %v2146
    %v2218 = vunpack.c.l.b16 %v2147
    %v2219 = vunpack.c.l.b16 %v2148
    %v2220 = vunpack.c.l.b16 %v2149
    %v2221 = vunpack.c.l.b16 %v2150
    %v2222 = vunpack.c.l.b16 %v2151
    %v2223 = vunpack.c.l.b16 %v2152
    %v2224 = vunpack.c.l.b16 %v2153
    %v2225 = vunpack.c.l.b16 %v2154
    %v2226 = vunpack.c.l.b16 %v2155
    %v2227 = vunpack.c.l.b16 %v2156
    %v2228 = vunpack.c.l.b16 %v2157
    %v2229 = vunpack.c.l.b16 %v2158
    %v2230 = vunpack.c.l.b16 %v2159
    %v2231 = vunpack.c.l.b16 %v2160
    %v2232 = vunpack.c.l.b16 %v2161
    %v2233 = vunpack.c.l.b16 %v2162
    %v2234 = vunpack.c.l.b16 %v2163
    %v2235 = vunpack.c.l.b16 %v2164
    %v2236 = vunpack.c.l.b16 %v2165
    %v2237 = vunpack.c.l.b16 %v2166
    %v2238 = vunpack.c.l.b16 %v2167
    %v2239 = vunpack.c.l.b16 %v2168
    %v2240 = vunpack.c.l.b16 %v2169
    %v2241 = vunpack.c.l.b16 %v2170
    %v2242 = vunpack.c.l.b16 %v2171
    %v2243 = vpack.c.b16 %v2212, %v2211
    %v2244 = vpack.c.b16 %v2214, %v2213
    %v2245 = vpack.c.b16 %v2216, %v2215
    %v2246 = vpack.c.b16 %v2218, %v2217
    %v2247 = vpack.c.b16 %v2220, %v2219
    %v2248 = vpack.c.b16 %v2222, %v2221
    %v2249 = vpack.c.b16 %v2224, %v2223
    %v2250 = vpack.c.b16 %v2226, %v2225
    %v2251 = vpack.c.b16 %v2228, %v2227
    %v2252 = vpack.c.b16 %v2230, %v2229
    %v2253 = vpack.c.b16 %v2232, %v2231
    %v2254 = vpack.c.b16 %v2234, %v2233
    %v2255 = vpack.c.b16 %v2236, %v2235
    %v2256 = vpack.c.b16 %v2238, %v2237
    %v2257 = vpack.c.b16 %v2240, %v2239
    %v2258 = vpack.c.b16 %v2242, %v2241
    %2275 = vmatprep.subr.bf16.mxu0 0
    %2276 = vmatpush1.bf16.msra.mxu0 %v2243
    %2277 = vmatprep.subr.bf16.mxu0 0
    %2278 = vmatpush1.bf16.msra.mxu0 %v2244
    %2279 = vmatprep.subr.bf16.mxu0 0
    %2280 = vmatpush1.bf16.msra.mxu0 %v2245
    %2281 = vmatprep.subr.bf16.mxu0 0
    %2282 = vmatpush1.bf16.msra.mxu0 %v2246
    %2283 = vmatprep.subr.bf16.mxu0 0
    %2284 = vmatpush1.bf16.msra.mxu0 %v2247
    %2285 = vmatprep.subr.bf16.mxu0 0
    %2286 = vmatpush1.bf16.msra.mxu0 %v2248
    %2287 = vmatprep.subr.bf16.mxu0 0
    %2288 = vmatpush1.bf16.msra.mxu0 %v2249
    %2289 = vmatprep.subr.bf16.mxu0 0
    %2290 = vmatpush1.bf16.msra.mxu0 %v2250
    %2291 = vmatprep.subr.bf16.mxu0 0
    %2292 = vmatpush1.bf16.msra.mxu0 %v2251
    %2293 = vmatprep.subr.bf16.mxu0 0
    %2294 = vmatpush1.bf16.msra.mxu0 %v2252
    %2295 = vmatprep.subr.bf16.mxu0 0
    %2296 = vmatpush1.bf16.msra.mxu0 %v2253
    %2297 = vmatprep.subr.bf16.mxu0 0
    %2298 = vmatpush1.bf16.msra.mxu0 %v2254
    %2299 = vmatprep.subr.bf16.mxu0 0
    %2300 = vmatpush1.bf16.msra.mxu0 %v2255
    %2301 = vmatprep.subr.bf16.mxu0 0
    %2302 = vmatpush1.bf16.msra.mxu0 %v2256
    %2303 = vmatprep.subr.bf16.mxu0 0
    %2304 = vmatpush1.bf16.msra.mxu0 %v2257
    %2305 = vmatprep.subr.bf16.mxu0 0
    %2306 = vmatpush1.bf16.msra.mxu0 %v2258
    %2307 = vmatprep.mubr.bf16.mxu0 %v2139
    %2308 = vmatmul.mubr.bf16.gmra.mrb[0].mxu0 %v2138
    %v2309 = vpop.f32.mrb[0].mxu0
    %v2310 = vadd.f32 %v2177, %v2309
    %v2311 = vpop.f32.mrb[0].mxu0
    %v2312 = vpop.f32.mrb[0].mxu0
    %v2313 = vpop.f32.mrb[0].mxu0
    %2314 = vdwg.mxu0
    %v2315 = vmax.f32 %v2310, 0.0
    %v2316 = vpack.c.bf16 %v2315, %v2315
    %v2317 = vld [vmem:[#allocation9] sm:$0xf]
    %v2318 = vld [vmem:[#allocation9 + $0x4] sm:$0xf]
    %v2319 = vld [vmem:[#allocation9 + $0x8] sm:$0xf]
    %v2320 = vld [vmem:[#allocation9 + $0xc] sm:$0xf]
    %v2321 = vld [vmem:[#allocation9 + $0x10] sm:$0xf]
    %v2322 = vld [vmem:[#allocation9 + $0x14] sm:$0xf]
    %v2323 = vld [vmem:[#allocation9 + $0x18] sm:$0xf]
    %v2324 = vld [vmem:[#allocation9 + $0x1c] sm:$0xf]
    %v2325 = vld [vmem:[#allocation9 + $0x20] sm:$0xf]
    %v2326 = vld [vmem:[#allocation9 + $0x24] sm:$0xf]
    %v2327 = vld [vmem:[#allocation9 + $0x28] sm:$0xf]
    %v2328 = vld [vmem:[#allocation9 + $0x2c] sm:$0xf]
    %v2329 = vld [vmem:[#allocation9 + $0x30] sm:$0xf]
    %v2330 = vld [vmem:[#allocation9 + $0x34] sm:$0xf]
    %v2331 = vld [vmem:[#allocation9 + $0x38] sm:$0xf]
    %v2332 = vld [vmem:[#allocation9 + $0x3c] sm:$0xf]
    %v2333 = vld [vmem:[%s14] sm:$0x1]
    %v2335 = vlaneseq
    %v2336 = vshrl.u32 %v2335, 7
    %v2337 = vsub.s32 0, %v2336
    %v2338 = vrot.slane %v2333, %v2337
    %v2356 = vunpack.c.l.b16 %v2317
    %v2357 = vunpack.c.l.b16 %v2318
    %v2358 = vunpack.c.l.b16 %v2319
    %v2359 = vunpack.c.l.b16 %v2320
    %v2360 = vunpack.c.l.b16 %v2321
    %v2361 = vunpack.c.l.b16 %v2322
    %v2362 = vunpack.c.l.b16 %v2323
    %v2363 = vunpack.c.l.b16 %v2324
    %v2364 = vunpack.c.l.b16 %v2325
    %v2365 = vunpack.c.l.b16 %v2326
    %v2366 = vunpack.c.l.b16 %v2327
    %v2367 = vunpack.c.l.b16 %v2328
    %v2368 = vunpack.c.l.b16 %v2329
    %v2369 = vunpack.c.l.b16 %v2330
    %v2370 = vunpack.c.l.b16 %v2331
    %v2371 = vunpack.c.l.b16 %v2332
    %v2372 = vpack.c.b16 %v2357, %v2356
    %v2373 = vpack.c.b16 %v2359, %v2358
    %v2374 = vpack.c.b16 %v2361, %v2360
    %v2375 = vpack.c.b16 %v2363, %v2362
    %v2376 = vpack.c.b16 %v2365, %v2364
    %v2377 = vpack.c.b16 %v2367, %v2366
    %v2378 = vpack.c.b16 %v2369, %v2368
    %v2379 = vpack.c.b16 %v2371, %v2370
    %2388 = vmatprep.subr.bf16.mxu0 0
    %2389 = vmatpush1.bf16.msra.mxu0 %v2372
    %2390 = vmatprep.subr.bf16.mxu0 0
    %2391 = vmatpush1.bf16.msra.mxu0 %v2373
    %2392 = vmatprep.subr.bf16.mxu0 0
    %2393 = vmatpush1.bf16.msra.mxu0 %v2374
    %2394 = vmatprep.subr.bf16.mxu0 0
    %2395 = vmatpush1.bf16.msra.mxu0 %v2375
    %2396 = vmatprep.subr.bf16.mxu0 0
    %2397 = vmatpush1.bf16.msra.mxu0 %v2376
    %2398 = vmatprep.subr.bf16.mxu0 0
    %2399 = vmatpush1.bf16.msra.mxu0 %v2377
    %2400 = vmatprep.subr.bf16.mxu0 0
    %2401 = vmatpush1.bf16.msra.mxu0 %v2378
    %2402 = vmatprep.subr.bf16.mxu0 0
    %2403 = vmatpush1.bf16.msra.mxu0 %v2379
    %2404 = vmatprep.subr.bf16.mxu0 0
    %2405 = vmatpush1.bf16.msra.mxu0 0
    %2406 = vmatprep.subr.bf16.mxu0 0
    %2407 = vmatpush1.bf16.msra.mxu0 0
    %2408 = vmatprep.subr.bf16.mxu0 0
    %2409 = vmatpush1.bf16.msra.mxu0 0
    %2410 = vmatprep.subr.bf16.mxu0 0
    %2411 = vmatpush1.bf16.msra.mxu0 0
    %2412 = vmatprep.subr.bf16.mxu0 0
    %2413 = vmatpush1.bf16.msra.mxu0 0
    %2414 = vmatprep.subr.bf16.mxu0 0
    %2415 = vmatpush1.bf16.msra.mxu0 0
    %2416 = vmatprep.subr.bf16.mxu0 0
    %2417 = vmatpush1.bf16.msra.mxu0 0
    %2418 = vmatprep.subr.bf16.mxu0 0
    %2419 = vmatpush1.bf16.msra.mxu0 0
    %2420 = vmatprep.mubr.bf16.mxu0 0
    %2421 = vmatmul.mubr.bf16.gmra.mrb[0].mxu0 %v2316
    %v2422 = vpop.f32.mrb[0].mxu0
    %v2423 = vadd.f32 %v2338, %v2422
    %v2424 = vpop.f32.mrb[0].mxu0
    %v2425 = vpop.f32.mrb[0].mxu0
    %v2426 = vpop.f32.mrb[0].mxu0
    %2427 = vdwg.mxu0
    %vm2428 = vcmp.lt.s32.totalorder %v122, 7
    %v2429 = vsel %vm2428, %v2423, -1e+30
    %2430 = vmax.xlane.f32.xlu0 %v2429
    %v2431 = vpop.xlane.xlu0 %2430
    %v2432 = vsub.f32 %v2429, %v2431
    %v2433 = vmul.f32 %v2432, 1.442695
    %v2434 = vpow.pop %v2433
    %v2435 = vsel %vm2428, %v2434, 0.0
    %2436 = vadd.xlane.f32.xlu0 %v2435
    %v2437 = vpop.xlane.xlu0 %2436
    %v2438 = vlog2.pop %v2437
    %v2439 = vmul.f32 %v2438, 0.6931472
    %v2440 = vsub.f32 %v2432, %v2439
    %vm2441 = vcmp.eq.s32.totalorder %v122, 7
    %v2442 = vsel %vm2441, %v2423, 0.0
    %v2443 = vsel %vm2428, %v2440, %v2442
    %2444 = vst [vmem:[%s15] sm:$0xff] %v2443
    // Predicated region
    $region82: #{acmodel_forward.1} parent=1 // pred_check
      _
    $region83: #{acmodel_forward.1} parent=1 // pred_check_branch
      %2446 = sbr.rel (0) target = $region85
    $region84: #{acmodel_forward.1} parent=1 // pred_region
      _
    $region85: #{acmodel_forward.1} parent=1 // pred_fallthru
      _
    // Predicated region
    $region86: #{acmodel_forward.1} parent=1 // pred_check
      _
    $region87: #{acmodel_forward.1} parent=1 // pred_check_branch
      %2448 = sbr.rel (0) target = $region89
    $region88: #{acmodel_forward.1} parent=1 // pred_region
      _
    $region89: #{acmodel_forward.1} parent=1 // pred_fallthru
      _
    %2449 = vsyncpa [#allocation3], 1
    %2450 = vsyncpa [#allocation5], 1
    %2451 = vsyncpa [#allocation8], 1

</llo_original>
